<compile_context>
chip_gen: v6e
topology: v6e:2x2x1
jax: 0.10.0
libtpu: 0.0.40
codegen_flags: <defaults>
</compile_context>

<pallas_src>
import functools
import math

import jax
import jax.numpy as jnp
from jax import lax
from jax.experimental import pallas as pl
from jax.experimental.pallas import tpu as pltpu

LN_EPS = 1e-5        # PyTorch nn.LayerNorm default
_FLOOR_EPS = 1e-6    # guards float floor() used to build integer-valued masks
_NEG_INF = -1e30


# ------------------------------ parameter slab layout ------------------------------

_VEC_NAMES = ("norm_p_g", "norm_p_b", "norm_f_g", "norm_f_b",
              "sa_bqkv", "sa_bo", "ca_bq", "ca_bkv", "ca_bo",
              "ffn_g", "ffn_b", "ffn_b1", "ffn_b2")


def _slab_layout(p_dim, f_dim, mid_dim):
    """Row offsets of every parameter block inside the single (rows, 128) f32 slab."""
    E = p_dim + f_dim
    assert 3 * E <= 128 and mid_dim <= 128 and f_dim <= 128, "slab assumes <=128-lane blocks"
    off, r = {}, 0

    def block(name, rows):
        nonlocal r
        off[name] = r
        r += rows

    block("sa_wqkv", E)       # (E, 3E)
    block("sa_wo", E)         # (E, E)
    block("ca_wq", E)         # (E, E)
    block("ca_wkv", E)        # (E, 2E)
    block("ca_wo", E)         # (E, E)
    block("ffn_w1", f_dim)    # (f, mid)
    block("ffn_w2", mid_dim)  # (mid, f)
    for name in _VEC_NAMES:   # one row per bias / gain vector
        block(name, 1)
    total = ((r + 7) // 8) * 8
    return off, total


def pack_params(params, p_dim, f_dim, mid_dim):
    """Pack all weights/biases into one (rows, 128) f32 slab.  Call once, outside the jit."""
    off, total = _slab_layout(p_dim, f_dim, mid_dim)
    sa, ca, fp = params["self_attn"], params["cross_attn"], params["ffn"]

    mats = {
        "sa_wqkv": jnp.concatenate([sa["wq"], sa["wk"], sa["wv"]], axis=1),
        "sa_wo": sa["wo"],
        "ca_wq": ca["wq"],
        "ca_wkv": jnp.concatenate([ca["wk"], ca["wv"]], axis=1),
        "ca_wo": ca["wo"],
        "ffn_w1": fp["w1"],
        "ffn_w2": fp["w2"],
    }
    vecs = {
        "norm_p_g": params["norm_p_g"], "norm_p_b": params["norm_p_b"],
        "norm_f_g": params["norm_f_g"], "norm_f_b": params["norm_f_b"],
        "sa_bqkv": jnp.concatenate([sa["bq"], sa["bk"], sa["bv"]]),
        "sa_bo": sa["bo"],
        "ca_bq": ca["bq"],
        "ca_bkv": jnp.concatenate([ca["bk"], ca["bv"]]),
        "ca_bo": ca["bo"],
        "ffn_g": fp["g"], "ffn_b": fp["b"],
        "ffn_b1": fp["b1"], "ffn_b2": fp["b2"],
    }

    slab = jnp.zeros((total, 128), jnp.float32)
    for name, a in mats.items():
        a = jnp.asarray(a, jnp.float32)
        slab = slab.at[off[name]:off[name] + a.shape[0], 0:a.shape[1]].set(a)
    for name, a in vecs.items():
        a = jnp.asarray(a, jnp.float32).reshape(-1)
        slab = slab.at[off[name], 0:a.shape[0]].set(a)
    return slab


# ------------------------------ in-kernel helpers ------------------------------

def _layernorm(x, g, b):
    mean = jnp.mean(x, axis=-1, keepdims=True)
    var = jnp.mean((x - mean) ** 2, axis=-1, keepdims=True)
    return (x - mean) * lax.rsqrt(var + LN_EPS) * g + b


def _erf_poly(x):
    # Abramowitz & Stegun 7.1.26, |err| < 1.5e-7 — keeps the exact-erf GELU semantics of
    # nn.GELU(); the exp goes to the EUP, the rest is a handful of VALU ops on (R, mid) tiles.
    a1, a2, a3, a4, a5 = 0.254829592, -0.284496736, 1.421413741, -1.453152027, 1.061405429
    p = 0.3275911
    s = jnp.where(x >= 0.0, 1.0, -1.0)
    ax = jnp.abs(x)
    t = 1.0 / (1.0 + p * ax)
    y = 1.0 - (((((a5 * t + a4) * t + a3) * t + a2) * t + a1) * t) * jnp.exp(-ax * ax)
    return s * y


def _gelu_exact(x):
    return 0.5 * x * (1.0 + _erf_poly(x * (1.0 / math.sqrt(2.0))))


def _attention(q, k, v, head_mask, batch_bias, num_heads, scale):
    """Batched multi-head attention over interleaved batch rows, without per-head lane slices.

    q, k, v: (R, E) with R = N*L rows interleaved as r = l*N + n (batch = r mod N).
    Heads occupy contiguous lane ranges of width hd = E // nh.  Queries are replicated nh
    times along sublanes and lane-masked to their head, so every head's scores come out of a
    single (nh*R, E) x (E, R) MXU matmul; `batch_bias` (additive 0 / -1e30) keeps rows from
    attending across batch elements.  The head "concat" falls out of the lane mask.
    """
    R, _ = q.shape
    q_rep = jnp.concatenate([q * scale] * num_heads, axis=0)            # (nh*R, E)
    qm = q_rep * head_mask

    s = lax.dot_general(qm, k, (((1,), (1,)), ((), ())),
                        preferred_element_type=jnp.float32)             # (nh*R, R)
    s = s + batch_bias
    s = s - jnp.max(s, axis=-1, keepdims=True)
    p = jnp.exp(s)
    denom = jnp.sum(p, axis=-1, keepdims=True)
    inv = pl.reciprocal(denom, approx=True)
    inv = inv * (2.0 - denom * inv)          # one Newton-Raphson step, effectively free (VPU)
    p = p * inv

    o_rep = jnp.dot(p, v, preferred_element_type=jnp.float32)           # (nh*R, E)
    om = o_rep * head_mask
    out = om[0:R]
    for h in range(1, num_heads):            # sublane slices at multiples of R (vreg-aligned)
        out = out + om[h * R:(h + 1) * R]
    return out                                                           # (R, E)


# ---------------------------------- fused kernel ----------------------------------

def _trs_decoder_kernel(prob_ref, feat_ref, graph_ref, slab_ref, out_ref, *,
                        num_heads, p_dim, f_dim, mid_dim, n_batch, off):
    f32 = jnp.float32
    E = p_dim + f_dim
    R = prob_ref.shape[0]       # N * L interleaved rows (r = l*N + n)
    L = graph_ref.shape[0]
    nh = num_heads
    hd = E // nh
    scale = 1.0 / math.sqrt(hd)

    def w(name, rows, cols):    # static sublane/lane slice of the packed weight slab
        r0 = off[name]
        return slab_ref[r0:r0 + rows, 0:cols]

    def vec(name, cols):        # (1, cols) bias/gain row; broadcasts over R rows
        r0 = off[name]
        return slab_ref[r0:r0 + 1, 0:cols]

    p_in = prob_ref[...].astype(f32)        # (R, p)
    f_in = feat_ref[...].astype(f32)        # (R, f)
    g_in = graph_ref[...].astype(f32)       # (L, f) — shared across batch

    # ---- layer norms on the two halves, then the single lane-concats used everywhere ----
    norm_p = _layernorm(p_in, vec("norm_p_g", p_dim), vec("norm_p_b", p_dim))
    norm_f = _layernorm(f_in, vec("norm_f_g", f_dim), vec("norm_f_b", f_dim))
    x = jnp.concatenate([p_in, f_in], axis=1)            # (R, E) residual stream
    x_norm = jnp.concatenate([norm_p, norm_f], axis=1)   # (R, E)

    # ---- broadcast graph over batch with a tiny constant-matrix matmul: row r <- l = r//N ----
    row_f = lax.broadcasted_iota(jnp.int32, (R, L), 0).astype(f32)
    col_f = lax.broadcasted_iota(jnp.int32, (R, L), 1).astype(f32)
    bmat = (jnp.floor(row_f * (1.0 / n_batch) + _FLOOR_EPS) == col_f).astype(f32)
    g_rep = jnp.dot(bmat, g_in, preferred_element_type=f32)             # (R, f)

    # ---- masks: built once, shared by both attention cores ----
    rows = nh * R
    rid = lax.broadcasted_iota(jnp.int32, (rows, E), 0).astype(f32)
    lid = lax.broadcasted_iota(jnp.int32, (rows, E), 1).astype(f32)
    head_mask = (jnp.floor(rid * (1.0 / R) + _FLOOR_EPS) ==
                 jnp.floor(lid * (1.0 / hd) + _FLOOR_EPS)).astype(f32)  # (nh*R, E)

    def _modn(v):
        return v - n_batch * jnp.floor(v * (1.0 / n_batch) + _FLOOR_EPS)

    rid2 = lax.broadcasted_iota(jnp.int32, (rows, R), 0).astype(f32)
    cid2 = lax.broadcasted_iota(jnp.int32, (rows, R), 1).astype(f32)
    batch_bias = jnp.where(_modn(rid2) == _modn(cid2), 0.0, _NEG_INF).astype(f32)  # (nh*R, R)

    # ---- self attention: Q = K = V = x_norm, residual = x, fused (E, 3E) projection ----
    qkv = (jnp.dot(x_norm, w("sa_wqkv", E, 3 * E), preferred_element_type=f32)
           + vec("sa_bqkv", 3 * E))                                     # (R, 3E)
    q1, k1, v1 = qkv[:, 0:E], qkv[:, E:2 * E], qkv[:, 2 * E:3 * E]
    a1 = _attention(q1, k1, v1, head_mask, batch_bias, nh, scale)
    x = x + jnp.dot(a1, w("sa_wo", E, E), preferred_element_type=f32) + vec("sa_bo", E)

    # ---- cross attention: Q = x, K = V = [norm_p | graph], fused (E, 2E) K/V projection ----
    mem = jnp.concatenate([norm_p, g_rep], axis=1)                      # (R, E)
    q2 = jnp.dot(x, w("ca_wq", E, E), preferred_element_type=f32) + vec("ca_bq", E)
    kv = (jnp.dot(mem, w("ca_wkv", E, 2 * E), preferred_element_type=f32)
          + vec("ca_bkv", 2 * E))                                       # (R, 2E)
    k2, v2 = kv[:, 0:E], kv[:, E:2 * E]
    a2 = _attention(q2, k2, v2, head_mask, batch_bias, nh, scale)
    y = x + jnp.dot(a2, w("ca_wo", E, E), preferred_element_type=f32) + vec("ca_bo", E)

    # ---- feed-forward on the feature half: y_f + Linear(GELU(Linear(LN(y_f)))) ----
    y_p = y[:, 0:p_dim]
    y_f = y[:, p_dim:E]
    h = _layernorm(y_f, vec("ffn_g", f_dim), vec("ffn_b", f_dim))
    h = jnp.dot(h, w("ffn_w1", f_dim, mid_dim), preferred_element_type=f32) + vec("ffn_b1", mid_dim)
    h = _gelu_exact(h)
    y_f = y_f + jnp.dot(h, w("ffn_w2", mid_dim, f_dim), preferred_element_type=f32) + vec("ffn_b2", f_dim)

    # single lane-dense merged output [y_p | y_f]; split in the wrapper for free
    out_ref[...] = jnp.concatenate([y_p, y_f], axis=1).astype(out_ref.dtype)


# ---------------------------------- module forward ----------------------------------

def trs_decoder_layer(slab, seq_graph, seq_prob, seq_feature, *,
                      num_heads, p_dim, f_dim, mid_dim):
    L, N, _ = seq_prob.shape
    E = p_dim + f_dim
    R = L * N

    # Contiguous (free) host reshapes only — no transposes, no broadcasts, no concats.
    prob2d = seq_prob.reshape(R, p_dim)      # row r = l*N + n
    feat2d = seq_feature.reshape(R, f_dim)
    graph2d = seq_graph.reshape(L, f_dim)

    off, _ = _slab_layout(p_dim, f_dim, mid_dim)
    kernel = functools.partial(_trs_decoder_kernel, num_heads=num_heads, p_dim=p_dim,
                               f_dim=f_dim, mid_dim=mid_dim, n_batch=N, off=off)

    y2d = pl.pallas_call(
        kernel,
        out_shape=jax.ShapeDtypeStruct((R, E), seq_prob.dtype),
        grid=(1,),  # single fused step; whole problem (~10 KB activations + ~116 KB weights) in VMEM
        in_specs=[pl.BlockSpec((R, p_dim), lambda i: (0, 0)),
                  pl.BlockSpec((R, f_dim), lambda i: (0, 0)),
                  pl.BlockSpec((L, f_dim), lambda i: (0, 0)),
                  pl.BlockSpec(slab.shape, lambda i: (0, 0))],
        out_specs=pl.BlockSpec((R, E), lambda i: (0, 0)),
        compiler_params=pltpu.CompilerParams(dimension_semantics=("arbitrary",)),
    )(prob2d, feat2d, graph2d, slab)

    y = y2d.reshape(L, N, E)                 # contiguous reshape, free
    return y[:, :, :p_dim], y[:, :, p_dim:]


# ------------------------------ params + pure-JAX reference ------------------------------

def init_params(key, f_dim, p_dim, mid_dim):
    E = f_dim + p_dim
    keys = iter(jax.random.split(key, 40))

    def nrm(shape, scale=0.1):
        return scale * jax.random.normal(next(keys), shape, dtype=jnp.float32)

    def attn():
        # Weights stored pre-transposed (y = x @ W), matching nn.MultiheadAttention math.
        return dict(wq=nrm((E, E)), wk=nrm((E, E)), wv=nrm((E, E)),
                    bq=nrm((E,)), bk=nrm((E,)), bv=nrm((E,)),
                    wo=nrm((E, E)), bo=nrm((E,)))

    return dict(
        norm_p_g=1.0 + nrm((p_dim,)), norm_p_b=nrm((p_dim,)),
        norm_f_g=1.0 + nrm((f_dim,)), norm_f_b=nrm((f_dim,)),
        self_attn=attn(), cross_attn=attn(),
        ffn=dict(g=1.0 + nrm((f_dim,)), b=nrm((f_dim,)),
                 w1=nrm((f_dim, mid_dim)), b1=nrm((mid_dim,)),
                 w2=nrm((mid_dim, f_dim)), b2=nrm((f_dim,))),
    )


def _ref_ln(x, g, b):
    m = x.mean(-1, keepdims=True)
    v = ((x - m) ** 2).mean(-1, keepdims=True)
    return (x - m) / jnp.sqrt(v + LN_EPS) * g + b


def _ref_mha(res_b, q_b, kv_b, ap, num_heads):
    q = q_b @ ap["wq"] + ap["bq"]
    k = kv_b @ ap["wk"] + ap["bk"]
    v = kv_b @ ap["wv"] + ap["bv"]
    N, Lq, E = q.shape
    Lk = k.shape[1]
    hd = E // num_heads
    qh = q.reshape(N, Lq, num_heads, hd).transpose(0, 2, 1, 3)
    kh = k.reshape(N, Lk, num_heads, hd).transpose(0, 2, 1, 3)
    vh = v.reshape(N, Lk, num_heads, hd).transpose(0, 2, 1, 3)
    s = jnp.einsum("nhqd,nhkd->nhqk", qh, kh) / math.sqrt(hd)
    p = jax.nn.softmax(s, axis=-1)
    o = jnp.einsum("nhqk,nhkd->nhqd", p, vh).transpose(0, 2, 1, 3).reshape(N, Lq, E)
    return res_b + o @ ap["wo"] + ap["bo"]


def ref_forward(params, seq_graph, seq_prob, seq_feature, num_heads):
    L, N, p_dim = seq_prob.shape
    f_dim = seq_feature.shape[2]
    norm_p = _ref_ln(seq_prob, params["norm_p_g"], params["norm_p_b"])
    norm_f = _ref_ln(seq_feature, params["norm_f_g"], params["norm_f_b"])
    x = jnp.concatenate([seq_prob, seq_feature], axis=2)
    x_norm = jnp.concatenate([norm_p, norm_f], axis=2)
    x_b = jnp.transpose(x, (1, 0, 2))
    xn_b = jnp.transpose(x_norm, (1, 0, 2))
    x_b = _ref_mha(x_b, xn_b, xn_b, params["self_attn"], num_heads)
    memory = jnp.concatenate([norm_p, jnp.broadcast_to(seq_graph, (L, N, f_dim))], axis=2)
    mem_b = jnp.transpose(memory, (1, 0, 2))
    y_b = _ref_mha(x_b, x_b, mem_b, params["cross_attn"], num_heads)
    y = jnp.transpose(y_b, (1, 0, 2))
    y_p, y_f = y[:, :, :p_dim], y[:, :, p_dim:]
    fp = params["ffn"]
    h = _ref_ln(y_f, fp["g"], fp["b"])
    h = jax.nn.gelu(h @ fp["w1"] + fp["b1"], approximate=False)
    y_f = y_f + h @ fp["w2"] + fp["b2"]
    return y_p, y_f


# ----------------------------------------- main -----------------------------------------

if __name__ == "__main__":
    feature_dim, prob_dim, num_heads, mid_dim = 24, 8, 4, 32   # embed_dim = 32
    L, N = 8, 2

    key = jax.random.PRNGKey(0)
    kp, kg, kpr, kft = jax.random.split(key, 4)
    params = init_params(kp, feature_dim, prob_dim, mid_dim)
    seq_graph = jax.random.normal(kg, (L, 1, feature_dim), dtype=jnp.float32)
    seq_prob = jax.random.normal(kpr, (L, N, prob_dim), dtype=jnp.float32)
    seq_feature = jax.random.normal(kft, (L, N, feature_dim), dtype=jnp.float32)

    # Pack the 31 weight/bias tensors into one slab once, outside the jitted forward.
    slab = pack_params(params, prob_dim, feature_dim, mid_dim)

    fwd = jax.jit(functools.partial(trs_decoder_layer, num_heads=num_heads, p_dim=prob_dim,
                                    f_dim=feature_dim, mid_dim=mid_dim))
    y_p, y_f = fwd(slab, seq_graph, seq_prob, seq_feature)
    jax.block_until_ready((y_p, y_f))

    r_p, r_f = ref_forward(params, seq_graph, seq_prob, seq_feature, num_heads)
    assert y_p.shape == (L, N, prob_dim) and y_f.shape == (L, N, feature_dim)
    # Remaining error floor: default-precision f32 MXU matmul passes on BOTH paths; the
    # Newton-refined EUP reciprocal in softmax is now well below that floor.
    assert jnp.allclose(y_p, r_p, atol=1e-2, rtol=1e-2), float(jnp.max(jnp.abs(y_p - r_p)))
    assert jnp.allclose(y_f, r_f, atol=1e-2, rtol=1e-2), float(jnp.max(jnp.abs(y_f - r_f)))
    print("KERNEL_OK")
</pallas_src>

<mosaic_0001>
module attributes {stable_mosaic.version = 11 : i64} {
  func.func @_trs_decoder_kernel(%arg0: i32, %arg1: memref<16x8xf32, #tpu.memory_space<vmem>>, %arg2: memref<16x24xf32, #tpu.memory_space<vmem>>, %arg3: memref<8x24xf32, #tpu.memory_space<vmem>>, %arg4: memref<232x128xf32, #tpu.memory_space<vmem>>, %arg5: memref<16x32xf32, #tpu.memory_space<vmem>>) attributes {dimension_semantics = [#tpu.dimension_semantics<arbitrary>], iteration_bounds = array<i64: 1>, scalar_prefetch = 0 : i64, scratch_operands = 0 : i64, tpu.core_type = #tpu.core_type<tc>, window_params = [{pipeline_mode = #tpu.pipeline_mode<synchronous>, transform_indices = @transform_0, window_bounds = array<i64: 16, 8>}, {pipeline_mode = #tpu.pipeline_mode<synchronous>, transform_indices = @transform_1, window_bounds = array<i64: 16, 24>}, {pipeline_mode = #tpu.pipeline_mode<synchronous>, transform_indices = @transform_2, window_bounds = array<i64: 8, 24>}, {pipeline_mode = #tpu.pipeline_mode<synchronous>, transform_indices = @transform_3, window_bounds = array<i64: 232, 128>}, {pipeline_mode = #tpu.pipeline_mode<synchronous>, transform_indices = @transform_4, window_bounds = array<i64: 16, 32>}]} {
    %c0 = arith.constant 0 : index
    %c0_0 = arith.constant 0 : index
    %0 = vector.load %arg1[%c0, %c0_0] : memref<16x8xf32, #tpu.memory_space<vmem>>, vector<16x8xf32>
    %c0_1 = arith.constant 0 : index
    %c0_2 = arith.constant 0 : index
    %1 = vector.load %arg2[%c0_1, %c0_2] : memref<16x24xf32, #tpu.memory_space<vmem>>, vector<16x24xf32>
    %c0_3 = arith.constant 0 : index
    %c0_4 = arith.constant 0 : index
    %2 = vector.load %arg3[%c0_3, %c0_4] : memref<8x24xf32, #tpu.memory_space<vmem>>, vector<8x24xf32>
    %c216 = arith.constant 216 : index
    %c0_5 = arith.constant 0 : index
    %3 = vector.load %arg4[%c216, %c0_5] : memref<232x128xf32, #tpu.memory_space<vmem>>, vector<1x8xf32>
    %c217 = arith.constant 217 : index
    %c0_6 = arith.constant 0 : index
    %4 = vector.load %arg4[%c217, %c0_6] : memref<232x128xf32, #tpu.memory_space<vmem>>, vector<1x8xf32>
    %cst = arith.constant dense<0.000000e+00> : vector<16xf32>
    %5 = vector.multi_reduction <add>, %0, %cst [1] : vector<16x8xf32> to vector<16xf32>
    %6 = vector.shape_cast %5 : vector<16xf32> to vector<16x1xf32>
    %cst_7 = arith.constant 8.000000e+00 : f32
    %7 = vector.broadcast %cst_7 : f32 to vector<16x1xf32>
    %8 = arith.divf %6, %7 : vector<16x1xf32>
    %9 = vector.broadcast %8 : vector<16x1xf32> to vector<16x8xf32>
    %10 = arith.subf %0, %9 : vector<16x8xf32>
    %11 = arith.mulf %10, %10 : vector<16x8xf32>
    %cst_8 = arith.constant dense<0.000000e+00> : vector<16xf32>
    %12 = vector.multi_reduction <add>, %11, %cst_8 [1] : vector<16x8xf32> to vector<16xf32>
    %13 = vector.shape_cast %12 : vector<16xf32> to vector<16x1xf32>
    %cst_9 = arith.constant 8.000000e+00 : f32
    %14 = vector.broadcast %cst_9 : f32 to vector<16x1xf32>
    %15 = arith.divf %13, %14 : vector<16x1xf32>
    %16 = vector.broadcast %8 : vector<16x1xf32> to vector<16x8xf32>
    %17 = arith.subf %0, %16 : vector<16x8xf32>
    %cst_10 = arith.constant 9.99999974E-6 : f32
    %18 = vector.broadcast %cst_10 : f32 to vector<16x1xf32>
    %19 = arith.addf %15, %18 : vector<16x1xf32>
    %20 = math.rsqrt %19 : vector<16x1xf32>
    %21 = vector.broadcast %20 : vector<16x1xf32> to vector<16x8xf32>
    %22 = arith.mulf %17, %21 : vector<16x8xf32>
    %23 = vector.broadcast %3 : vector<1x8xf32> to vector<16x8xf32>
    %24 = arith.mulf %22, %23 : vector<16x8xf32>
    %25 = vector.broadcast %4 : vector<1x8xf32> to vector<16x8xf32>
    %26 = arith.addf %24, %25 : vector<16x8xf32>
    %c218 = arith.constant 218 : index
    %c0_11 = arith.constant 0 : index
    %27 = vector.load %arg4[%c218, %c0_11] : memref<232x128xf32, #tpu.memory_space<vmem>>, vector<1x24xf32>
    %c219 = arith.constant 219 : index
    %c0_12 = arith.constant 0 : index
    %28 = vector.load %arg4[%c219, %c0_12] : memref<232x128xf32, #tpu.memory_space<vmem>>, vector<1x24xf32>
    %cst_13 = arith.constant dense<0.000000e+00> : vector<16xf32>
    %29 = vector.multi_reduction <add>, %1, %cst_13 [1] : vector<16x24xf32> to vector<16xf32>
    %30 = vector.shape_cast %29 : vector<16xf32> to vector<16x1xf32>
    %cst_14 = arith.constant 2.400000e+01 : f32
    %31 = vector.broadcast %cst_14 : f32 to vector<16x1xf32>
    %32 = arith.divf %30, %31 : vector<16x1xf32>
    %33 = vector.broadcast %32 : vector<16x1xf32> to vector<16x24xf32>
    %34 = arith.subf %1, %33 : vector<16x24xf32>
    %35 = arith.mulf %34, %34 : vector<16x24xf32>
    %cst_15 = arith.constant dense<0.000000e+00> : vector<16xf32>
    %36 = vector.multi_reduction <add>, %35, %cst_15 [1] : vector<16x24xf32> to vector<16xf32>
    %37 = vector.shape_cast %36 : vector<16xf32> to vector<16x1xf32>
    %cst_16 = arith.constant 2.400000e+01 : f32
    %38 = vector.broadcast %cst_16 : f32 to vector<16x1xf32>
    %39 = arith.divf %37, %38 : vector<16x1xf32>
    %40 = vector.broadcast %32 : vector<16x1xf32> to vector<16x24xf32>
    %41 = arith.subf %1, %40 : vector<16x24xf32>
    %cst_17 = arith.constant 9.99999974E-6 : f32
    %42 = vector.broadcast %cst_17 : f32 to vector<16x1xf32>
    %43 = arith.addf %39, %42 : vector<16x1xf32>
    %44 = math.rsqrt %43 : vector<16x1xf32>
    %45 = vector.broadcast %44 : vector<16x1xf32> to vector<16x24xf32>
    %46 = arith.mulf %41, %45 : vector<16x24xf32>
    %47 = vector.broadcast %27 : vector<1x24xf32> to vector<16x24xf32>
    %48 = arith.mulf %46, %47 : vector<16x24xf32>
    %49 = vector.broadcast %28 : vector<1x24xf32> to vector<16x24xf32>
    %50 = arith.addf %48, %49 : vector<16x24xf32>
    %51 = tpu.concatenate %0, %1 in 1 : vector<16x8xf32>, vector<16x24xf32> -> vector<16x32xf32>
    %52 = tpu.concatenate %26, %50 in 1 : vector<16x8xf32>, vector<16x24xf32> -> vector<16x32xf32>
    %53 = tpu.iota {dimensions = array<i32: 0>} : vector<16x8xi32>
    %54 = arith.sitofp %53 : vector<16x8xi32> to vector<16x8xf32>
    %55 = tpu.iota {dimensions = array<i32: 1>} : vector<16x8xi32>
    %56 = arith.sitofp %55 : vector<16x8xi32> to vector<16x8xf32>
    %cst_18 = arith.constant 5.000000e-01 : f32
    %57 = vector.broadcast %cst_18 : f32 to vector<16x8xf32>
    %58 = arith.mulf %54, %57 : vector<16x8xf32>
    %cst_19 = arith.constant 9.99999997E-7 : f32
    %59 = vector.broadcast %cst_19 : f32 to vector<16x8xf32>
    %60 = arith.addf %58, %59 : vector<16x8xf32>
    %61 = math.floor %60 : vector<16x8xf32>
    %62 = arith.cmpf oeq, %61, %56 : vector<16x8xf32>
    %63 = arith.extui %62 : vector<16x8xi1> to vector<16x8xi32>
    %64 = arith.sitofp %63 : vector<16x8xi32> to vector<16x8xf32>
    %cst_20 = arith.constant dense<0.000000e+00> : vector<16x24xf32>
    %65 = tpu.matmul %64, %2, %cst_20 {dimension_numbers = #tpu.dot_dimension_numbers<[1], [0], [0], [1], [0, 0, 1, 1], [], []>} : vector<16x8xf32>, vector<8x24xf32>, vector<16x24xf32> -> vector<16x24xf32>
    %66 = tpu.iota {dimensions = array<i32: 0>} : vector<64x32xi32>
    %67 = arith.sitofp %66 : vector<64x32xi32> to vector<64x32xf32>
    %68 = tpu.iota {dimensions = array<i32: 1>} : vector<64x32xi32>
    %69 = arith.sitofp %68 : vector<64x32xi32> to vector<64x32xf32>
    %cst_21 = arith.constant 6.250000e-02 : f32
    %70 = vector.broadcast %cst_21 : f32 to vector<64x32xf32>
    %71 = arith.mulf %67, %70 : vector<64x32xf32>
    %cst_22 = arith.constant 9.99999997E-7 : f32
    %72 = vector.broadcast %cst_22 : f32 to vector<64x32xf32>
    %73 = arith.addf %71, %72 : vector<64x32xf32>
    %74 = math.floor %73 : vector<64x32xf32>
    %cst_23 = arith.constant 1.250000e-01 : f32
    %75 = vector.broadcast %cst_23 : f32 to vector<64x32xf32>
    %76 = arith.mulf %69, %75 : vector<64x32xf32>
    %cst_24 = arith.constant 9.99999997E-7 : f32
    %77 = vector.broadcast %cst_24 : f32 to vector<64x32xf32>
    %78 = arith.addf %76, %77 : vector<64x32xf32>
    %79 = math.floor %78 : vector<64x32xf32>
    %80 = arith.cmpf oeq, %74, %79 : vector<64x32xf32>
    %81 = arith.extui %80 : vector<64x32xi1> to vector<64x32xi32>
    %82 = arith.sitofp %81 : vector<64x32xi32> to vector<64x32xf32>
    %83 = tpu.iota {dimensions = array<i32: 0>} : vector<64x16xi32>
    %84 = arith.sitofp %83 : vector<64x16xi32> to vector<64x16xf32>
    %85 = tpu.iota {dimensions = array<i32: 1>} : vector<64x16xi32>
    %86 = arith.sitofp %85 : vector<64x16xi32> to vector<64x16xf32>
    %cst_25 = arith.constant 5.000000e-01 : f32
    %87 = vector.broadcast %cst_25 : f32 to vector<64x16xf32>
    %88 = arith.mulf %84, %87 : vector<64x16xf32>
    %cst_26 = arith.constant 9.99999997E-7 : f32
    %89 = vector.broadcast %cst_26 : f32 to vector<64x16xf32>
    %90 = arith.addf %88, %89 : vector<64x16xf32>
    %91 = math.floor %90 : vector<64x16xf32>
    %cst_27 = arith.constant 2.000000e+00 : f32
    %92 = vector.broadcast %cst_27 : f32 to vector<64x16xf32>
    %93 = arith.mulf %92, %91 : vector<64x16xf32>
    %94 = arith.subf %84, %93 : vector<64x16xf32>
    %cst_28 = arith.constant 5.000000e-01 : f32
    %95 = vector.broadcast %cst_28 : f32 to vector<64x16xf32>
    %96 = arith.mulf %86, %95 : vector<64x16xf32>
    %cst_29 = arith.constant 9.99999997E-7 : f32
    %97 = vector.broadcast %cst_29 : f32 to vector<64x16xf32>
    %98 = arith.addf %96, %97 : vector<64x16xf32>
    %99 = math.floor %98 : vector<64x16xf32>
    %cst_30 = arith.constant 2.000000e+00 : f32
    %100 = vector.broadcast %cst_30 : f32 to vector<64x16xf32>
    %101 = arith.mulf %100, %99 : vector<64x16xf32>
    %102 = arith.subf %86, %101 : vector<64x16xf32>
    %103 = arith.cmpf oeq, %94, %102 : vector<64x16xf32>
    %cst_31 = arith.constant 0.000000e+00 : f32
    %cst_32 = arith.constant -1.000000e+30 : f32
    %104 = vector.broadcast %cst_31 : f32 to vector<64x16xf32>
    %105 = vector.broadcast %cst_32 : f32 to vector<64x16xf32>
    %106 = arith.select %103, %104, %105 : vector<64x16xi1>, vector<64x16xf32>
    %c0_33 = arith.constant 0 : index
    %c0_34 = arith.constant 0 : index
    %107 = vector.load %arg4[%c0_33, %c0_34] : memref<232x128xf32, #tpu.memory_space<vmem>>, vector<32x96xf32>
    %cst_35 = arith.constant dense<0.000000e+00> : vector<16x96xf32>
    %108 = tpu.matmul %52, %107, %cst_35 {dimension_numbers = #tpu.dot_dimension_numbers<[1], [0], [0], [1], [0, 0, 1, 1], [], []>} : vector<16x32xf32>, vector<32x96xf32>, vector<16x96xf32> -> vector<16x96xf32>
    %c220 = arith.constant 220 : index
    %c0_36 = arith.constant 0 : index
    %109 = vector.load %arg4[%c220, %c0_36] : memref<232x128xf32, #tpu.memory_space<vmem>>, vector<1x96xf32>
    %110 = vector.broadcast %109 : vector<1x96xf32> to vector<16x96xf32>
    %111 = arith.addf %108, %110 : vector<16x96xf32>
    %112 = vector.extract_strided_slice %111 {offsets = [0, 0], sizes = [16, 32], strides = [1, 1]} : vector<16x96xf32> to vector<16x32xf32>
    %113 = vector.extract_strided_slice %111 {offsets = [0, 32], sizes = [16, 32], strides = [1, 1]} : vector<16x96xf32> to vector<16x32xf32>
    %114 = vector.extract_strided_slice %111 {offsets = [0, 64], sizes = [16, 32], strides = [1, 1]} : vector<16x96xf32> to vector<16x32xf32>
    %cst_37 = arith.constant 0.353553385 : f32
    %115 = vector.broadcast %cst_37 : f32 to vector<16x32xf32>
    %116 = arith.mulf %112, %115 : vector<16x32xf32>
    %117 = tpu.concatenate %116, %116, %116, %116 in 0 : vector<16x32xf32>, vector<16x32xf32>, vector<16x32xf32>, vector<16x32xf32> -> vector<64x32xf32>
    %118 = arith.mulf %117, %82 : vector<64x32xf32>
    %cst_38 = arith.constant dense<0.000000e+00> : vector<64x16xf32>
    %119 = tpu.matmul %118, %113, %cst_38 {dimension_numbers = #tpu.dot_dimension_numbers<[1], [1], [0], [0], [0, 0, 1, 0], [], []>} : vector<64x32xf32>, vector<16x32xf32>, vector<64x16xf32> -> vector<64x16xf32>
    %120 = arith.addf %119, %106 : vector<64x16xf32>
    %cst_39 = arith.constant dense<0xFF800000> : vector<64xf32>
    %121 = vector.multi_reduction <maximumf>, %120, %cst_39 [1] : vector<64x16xf32> to vector<64xf32>
    %122 = vector.shape_cast %121 : vector<64xf32> to vector<64x1xf32>
    %123 = vector.broadcast %122 : vector<64x1xf32> to vector<64x16xf32>
    %124 = arith.subf %120, %123 : vector<64x16xf32>
    %125 = math.exp %124 : vector<64x16xf32>
    %cst_40 = arith.constant dense<0.000000e+00> : vector<64xf32>
    %126 = vector.multi_reduction <add>, %125, %cst_40 [1] : vector<64x16xf32> to vector<64xf32>
    %127 = vector.shape_cast %126 : vector<64xf32> to vector<64x1xf32>
    %128 = tpu.reciprocal %127 {approx = true} : vector<64x1xf32> -> vector<64x1xf32>
    %129 = arith.mulf %127, %128 : vector<64x1xf32>
    %cst_41 = arith.constant 2.000000e+00 : f32
    %130 = vector.broadcast %cst_41 : f32 to vector<64x1xf32>
    %131 = arith.subf %130, %129 : vector<64x1xf32>
    %132 = arith.mulf %128, %131 : vector<64x1xf32>
    %133 = vector.broadcast %132 : vector<64x1xf32> to vector<64x16xf32>
    %134 = arith.mulf %125, %133 : vector<64x16xf32>
    %cst_42 = arith.constant dense<0.000000e+00> : vector<64x32xf32>
    %135 = tpu.matmul %134, %114, %cst_42 {dimension_numbers = #tpu.dot_dimension_numbers<[1], [0], [0], [1], [0, 0, 1, 1], [], []>} : vector<64x16xf32>, vector<16x32xf32>, vector<64x32xf32> -> vector<64x32xf32>
    %136 = arith.mulf %135, %82 : vector<64x32xf32>
    %137 = vector.extract_strided_slice %136 {offsets = [0, 0], sizes = [16, 32], strides = [1, 1]} : vector<64x32xf32> to vector<16x32xf32>
    %138 = vector.extract_strided_slice %136 {offsets = [16, 0], sizes = [16, 32], strides = [1, 1]} : vector<64x32xf32> to vector<16x32xf32>
    %139 = arith.addf %137, %138 : vector<16x32xf32>
    %140 = vector.extract_strided_slice %136 {offsets = [32, 0], sizes = [16, 32], strides = [1, 1]} : vector<64x32xf32> to vector<16x32xf32>
    %141 = arith.addf %139, %140 : vector<16x32xf32>
    %142 = vector.extract_strided_slice %136 {offsets = [48, 0], sizes = [16, 32], strides = [1, 1]} : vector<64x32xf32> to vector<16x32xf32>
    %143 = arith.addf %141, %142 : vector<16x32xf32>
    %c32 = arith.constant 32 : index
    %c0_43 = arith.constant 0 : index
    %144 = vector.load %arg4[%c32, %c0_43] : memref<232x128xf32, #tpu.memory_space<vmem>>, vector<32x32xf32>
    %cst_44 = arith.constant dense<0.000000e+00> : vector<16x32xf32>
    %145 = tpu.matmul %143, %144, %cst_44 {dimension_numbers = #tpu.dot_dimension_numbers<[1], [0], [0], [1], [0, 0, 1, 1], [], []>} : vector<16x32xf32>, vector<32x32xf32>, vector<16x32xf32> -> vector<16x32xf32>
    %146 = arith.addf %51, %145 : vector<16x32xf32>
    %c221 = arith.constant 221 : index
    %c0_45 = arith.constant 0 : index
    %147 = vector.load %arg4[%c221, %c0_45] : memref<232x128xf32, #tpu.memory_space<vmem>>, vector<1x32xf32>
    %148 = vector.broadcast %147 : vector<1x32xf32> to vector<16x32xf32>
    %149 = arith.addf %146, %148 : vector<16x32xf32>
    %150 = tpu.concatenate %26, %65 in 1 : vector<16x8xf32>, vector<16x24xf32> -> vector<16x32xf32>
    %c64 = arith.constant 64 : index
    %c0_46 = arith.constant 0 : index
    %151 = vector.load %arg4[%c64, %c0_46] : memref<232x128xf32, #tpu.memory_space<vmem>>, vector<32x32xf32>
    %cst_47 = arith.constant dense<0.000000e+00> : vector<16x32xf32>
    %152 = tpu.matmul %149, %151, %cst_47 {dimension_numbers = #tpu.dot_dimension_numbers<[1], [0], [0], [1], [0, 0, 1, 1], [], []>} : vector<16x32xf32>, vector<32x32xf32>, vector<16x32xf32> -> vector<16x32xf32>
    %c222 = arith.constant 222 : index
    %c0_48 = arith.constant 0 : index
    %153 = vector.load %arg4[%c222, %c0_48] : memref<232x128xf32, #tpu.memory_space<vmem>>, vector<1x32xf32>
    %154 = vector.broadcast %153 : vector<1x32xf32> to vector<16x32xf32>
    %155 = arith.addf %152, %154 : vector<16x32xf32>
    %c96 = arith.constant 96 : index
    %c0_49 = arith.constant 0 : index
    %156 = vector.load %arg4[%c96, %c0_49] : memref<232x128xf32, #tpu.memory_space<vmem>>, vector<32x64xf32>
    %cst_50 = arith.constant dense<0.000000e+00> : vector<16x64xf32>
    %157 = tpu.matmul %150, %156, %cst_50 {dimension_numbers = #tpu.dot_dimension_numbers<[1], [0], [0], [1], [0, 0, 1, 1], [], []>} : vector<16x32xf32>, vector<32x64xf32>, vector<16x64xf32> -> vector<16x64xf32>
    %c223 = arith.constant 223 : index
    %c0_51 = arith.constant 0 : index
    %158 = vector.load %arg4[%c223, %c0_51] : memref<232x128xf32, #tpu.memory_space<vmem>>, vector<1x64xf32>
    %159 = vector.broadcast %158 : vector<1x64xf32> to vector<16x64xf32>
    %160 = arith.addf %157, %159 : vector<16x64xf32>
    %161 = vector.extract_strided_slice %160 {offsets = [0, 0], sizes = [16, 32], strides = [1, 1]} : vector<16x64xf32> to vector<16x32xf32>
    %162 = vector.extract_strided_slice %160 {offsets = [0, 32], sizes = [16, 32], strides = [1, 1]} : vector<16x64xf32> to vector<16x32xf32>
    %cst_52 = arith.constant 0.353553385 : f32
    %163 = vector.broadcast %cst_52 : f32 to vector<16x32xf32>
    %164 = arith.mulf %155, %163 : vector<16x32xf32>
    %165 = tpu.concatenate %164, %164, %164, %164 in 0 : vector<16x32xf32>, vector<16x32xf32>, vector<16x32xf32>, vector<16x32xf32> -> vector<64x32xf32>
    %166 = arith.mulf %165, %82 : vector<64x32xf32>
    %cst_53 = arith.constant dense<0.000000e+00> : vector<64x16xf32>
    %167 = tpu.matmul %166, %161, %cst_53 {dimension_numbers = #tpu.dot_dimension_numbers<[1], [1], [0], [0], [0, 0, 1, 0], [], []>} : vector<64x32xf32>, vector<16x32xf32>, vector<64x16xf32> -> vector<64x16xf32>
    %168 = arith.addf %167, %106 : vector<64x16xf32>
    %cst_54 = arith.constant dense<0xFF800000> : vector<64xf32>
    %169 = vector.multi_reduction <maximumf>, %168, %cst_54 [1] : vector<64x16xf32> to vector<64xf32>
    %170 = vector.shape_cast %169 : vector<64xf32> to vector<64x1xf32>
    %171 = vector.broadcast %170 : vector<64x1xf32> to vector<64x16xf32>
    %172 = arith.subf %168, %171 : vector<64x16xf32>
    %173 = math.exp %172 : vector<64x16xf32>
    %cst_55 = arith.constant dense<0.000000e+00> : vector<64xf32>
    %174 = vector.multi_reduction <add>, %173, %cst_55 [1] : vector<64x16xf32> to vector<64xf32>
    %175 = vector.shape_cast %174 : vector<64xf32> to vector<64x1xf32>
    %176 = tpu.reciprocal %175 {approx = true} : vector<64x1xf32> -> vector<64x1xf32>
    %177 = arith.mulf %175, %176 : vector<64x1xf32>
    %cst_56 = arith.constant 2.000000e+00 : f32
    %178 = vector.broadcast %cst_56 : f32 to vector<64x1xf32>
    %179 = arith.subf %178, %177 : vector<64x1xf32>
    %180 = arith.mulf %176, %179 : vector<64x1xf32>
    %181 = vector.broadcast %180 : vector<64x1xf32> to vector<64x16xf32>
    %182 = arith.mulf %173, %181 : vector<64x16xf32>
    %cst_57 = arith.constant dense<0.000000e+00> : vector<64x32xf32>
    %183 = tpu.matmul %182, %162, %cst_57 {dimension_numbers = #tpu.dot_dimension_numbers<[1], [0], [0], [1], [0, 0, 1, 1], [], []>} : vector<64x16xf32>, vector<16x32xf32>, vector<64x32xf32> -> vector<64x32xf32>
    %184 = arith.mulf %183, %82 : vector<64x32xf32>
    %185 = vector.extract_strided_slice %184 {offsets = [0, 0], sizes = [16, 32], strides = [1, 1]} : vector<64x32xf32> to vector<16x32xf32>
    %186 = vector.extract_strided_slice %184 {offsets = [16, 0], sizes = [16, 32], strides = [1, 1]} : vector<64x32xf32> to vector<16x32xf32>
    %187 = arith.addf %185, %186 : vector<16x32xf32>
    %188 = vector.extract_strided_slice %184 {offsets = [32, 0], sizes = [16, 32], strides = [1, 1]} : vector<64x32xf32> to vector<16x32xf32>
    %189 = arith.addf %187, %188 : vector<16x32xf32>
    %190 = vector.extract_strided_slice %184 {offsets = [48, 0], sizes = [16, 32], strides = [1, 1]} : vector<64x32xf32> to vector<16x32xf32>
    %191 = arith.addf %189, %190 : vector<16x32xf32>
    %c128 = arith.constant 128 : index
    %c0_58 = arith.constant 0 : index
    %192 = vector.load %arg4[%c128, %c0_58] : memref<232x128xf32, #tpu.memory_space<vmem>>, vector<32x32xf32>
    %cst_59 = arith.constant dense<0.000000e+00> : vector<16x32xf32>
    %193 = tpu.matmul %191, %192, %cst_59 {dimension_numbers = #tpu.dot_dimension_numbers<[1], [0], [0], [1], [0, 0, 1, 1], [], []>} : vector<16x32xf32>, vector<32x32xf32>, vector<16x32xf32> -> vector<16x32xf32>
    %194 = arith.addf %149, %193 : vector<16x32xf32>
    %c224 = arith.constant 224 : index
    %c0_60 = arith.constant 0 : index
    %195 = vector.load %arg4[%c224, %c0_60] : memref<232x128xf32, #tpu.memory_space<vmem>>, vector<1x32xf32>
    %196 = vector.broadcast %195 : vector<1x32xf32> to vector<16x32xf32>
    %197 = arith.addf %194, %196 : vector<16x32xf32>
    %198 = vector.extract_strided_slice %197 {offsets = [0, 0], sizes = [16, 8], strides = [1, 1]} : vector<16x32xf32> to vector<16x8xf32>
    %199 = vector.extract_strided_slice %197 {offsets = [0, 8], sizes = [16, 24], strides = [1, 1]} : vector<16x32xf32> to vector<16x24xf32>
    %c225 = arith.constant 225 : index
    %c0_61 = arith.constant 0 : index
    %200 = vector.load %arg4[%c225, %c0_61] : memref<232x128xf32, #tpu.memory_space<vmem>>, vector<1x24xf32>
    %c226 = arith.constant 226 : index
    %c0_62 = arith.constant 0 : index
    %201 = vector.load %arg4[%c226, %c0_62] : memref<232x128xf32, #tpu.memory_space<vmem>>, vector<1x24xf32>
    %cst_63 = arith.constant dense<0.000000e+00> : vector<16xf32>
    %202 = vector.multi_reduction <add>, %199, %cst_63 [1] : vector<16x24xf32> to vector<16xf32>
    %203 = vector.shape_cast %202 : vector<16xf32> to vector<16x1xf32>
    %cst_64 = arith.constant 2.400000e+01 : f32
    %204 = vector.broadcast %cst_64 : f32 to vector<16x1xf32>
    %205 = arith.divf %203, %204 : vector<16x1xf32>
    %206 = vector.broadcast %205 : vector<16x1xf32> to vector<16x24xf32>
    %207 = arith.subf %199, %206 : vector<16x24xf32>
    %208 = arith.mulf %207, %207 : vector<16x24xf32>
    %cst_65 = arith.constant dense<0.000000e+00> : vector<16xf32>
    %209 = vector.multi_reduction <add>, %208, %cst_65 [1] : vector<16x24xf32> to vector<16xf32>
    %210 = vector.shape_cast %209 : vector<16xf32> to vector<16x1xf32>
    %cst_66 = arith.constant 2.400000e+01 : f32
    %211 = vector.broadcast %cst_66 : f32 to vector<16x1xf32>
    %212 = arith.divf %210, %211 : vector<16x1xf32>
    %213 = vector.broadcast %205 : vector<16x1xf32> to vector<16x24xf32>
    %214 = arith.subf %199, %213 : vector<16x24xf32>
    %cst_67 = arith.constant 9.99999974E-6 : f32
    %215 = vector.broadcast %cst_67 : f32 to vector<16x1xf32>
    %216 = arith.addf %212, %215 : vector<16x1xf32>
    %217 = math.rsqrt %216 : vector<16x1xf32>
    %218 = vector.broadcast %217 : vector<16x1xf32> to vector<16x24xf32>
    %219 = arith.mulf %214, %218 : vector<16x24xf32>
    %220 = vector.broadcast %200 : vector<1x24xf32> to vector<16x24xf32>
    %221 = arith.mulf %219, %220 : vector<16x24xf32>
    %222 = vector.broadcast %201 : vector<1x24xf32> to vector<16x24xf32>
    %223 = arith.addf %221, %222 : vector<16x24xf32>
    %c160 = arith.constant 160 : index
    %c0_68 = arith.constant 0 : index
    %224 = vector.load %arg4[%c160, %c0_68] : memref<232x128xf32, #tpu.memory_space<vmem>>, vector<24x32xf32>
    %cst_69 = arith.constant dense<0.000000e+00> : vector<16x32xf32>
    %225 = tpu.matmul %223, %224, %cst_69 {dimension_numbers = #tpu.dot_dimension_numbers<[1], [0], [0], [1], [0, 0, 1, 1], [], []>} : vector<16x24xf32>, vector<24x32xf32>, vector<16x32xf32> -> vector<16x32xf32>
    %c227 = arith.constant 227 : index
    %c0_70 = arith.constant 0 : index
    %226 = vector.load %arg4[%c227, %c0_70] : memref<232x128xf32, #tpu.memory_space<vmem>>, vector<1x32xf32>
    %227 = vector.broadcast %226 : vector<1x32xf32> to vector<16x32xf32>
    %228 = arith.addf %225, %227 : vector<16x32xf32>
    %cst_71 = arith.constant 5.000000e-01 : f32
    %229 = vector.broadcast %cst_71 : f32 to vector<16x32xf32>
    %230 = arith.mulf %229, %228 : vector<16x32xf32>
    %cst_72 = arith.constant 0.707106769 : f32
    %231 = vector.broadcast %cst_72 : f32 to vector<16x32xf32>
    %232 = arith.mulf %228, %231 : vector<16x32xf32>
    %cst_73 = arith.constant 0.000000e+00 : f32
    %233 = vector.broadcast %cst_73 : f32 to vector<16x32xf32>
    %234 = arith.cmpf oge, %232, %233 : vector<16x32xf32>
    %cst_74 = arith.constant 1.000000e+00 : f32
    %cst_75 = arith.constant -1.000000e+00 : f32
    %235 = vector.broadcast %cst_74 : f32 to vector<16x32xf32>
    %236 = vector.broadcast %cst_75 : f32 to vector<16x32xf32>
    %237 = arith.select %234, %235, %236 : vector<16x32xi1>, vector<16x32xf32>
    %238 = math.absf %232 : vector<16x32xf32>
    %cst_76 = arith.constant 0.327591091 : f32
    %239 = vector.broadcast %cst_76 : f32 to vector<16x32xf32>
    %240 = arith.mulf %239, %238 : vector<16x32xf32>
    %cst_77 = arith.constant 1.000000e+00 : f32
    %241 = vector.broadcast %cst_77 : f32 to vector<16x32xf32>
    %242 = arith.addf %241, %240 : vector<16x32xf32>
    %cst_78 = arith.constant 1.000000e+00 : f32
    %243 = vector.broadcast %cst_78 : f32 to vector<16x32xf32>
    %244 = arith.divf %243, %242 : vector<16x32xf32>
    %cst_79 = arith.constant 1.06140542 : f32
    %245 = vector.broadcast %cst_79 : f32 to vector<16x32xf32>
    %246 = arith.mulf %245, %244 : vector<16x32xf32>
    %cst_80 = arith.constant -1.45315206 : f32
    %247 = vector.broadcast %cst_80 : f32 to vector<16x32xf32>
    %248 = arith.addf %246, %247 : vector<16x32xf32>
    %249 = arith.mulf %248, %244 : vector<16x32xf32>
    %cst_81 = arith.constant 1.42141378 : f32
    %250 = vector.broadcast %cst_81 : f32 to vector<16x32xf32>
    %251 = arith.addf %249, %250 : vector<16x32xf32>
    %252 = arith.mulf %251, %244 : vector<16x32xf32>
    %cst_82 = arith.constant -0.284496725 : f32
    %253 = vector.broadcast %cst_82 : f32 to vector<16x32xf32>
    %254 = arith.addf %252, %253 : vector<16x32xf32>
    %255 = arith.mulf %254, %244 : vector<16x32xf32>
    %cst_83 = arith.constant 0.254829586 : f32
    %256 = vector.broadcast %cst_83 : f32 to vector<16x32xf32>
    %257 = arith.addf %255, %256 : vector<16x32xf32>
    %258 = arith.mulf %257, %244 : vector<16x32xf32>
    %cst_84 = arith.constant 0.000000e+00 : f32
    %259 = vector.broadcast %cst_84 : f32 to vector<16x32xf32>
    %260 = arith.subf %259, %238 : vector<16x32xf32>
    %261 = arith.mulf %260, %238 : vector<16x32xf32>
    %262 = math.exp %261 : vector<16x32xf32>
    %263 = arith.mulf %258, %262 : vector<16x32xf32>
    %cst_85 = arith.constant 1.000000e+00 : f32
    %264 = vector.broadcast %cst_85 : f32 to vector<16x32xf32>
    %265 = arith.subf %264, %263 : vector<16x32xf32>
    %266 = arith.mulf %237, %265 : vector<16x32xf32>
    %cst_86 = arith.constant 1.000000e+00 : f32
    %267 = vector.broadcast %cst_86 : f32 to vector<16x32xf32>
    %268 = arith.addf %267, %266 : vector<16x32xf32>
    %269 = arith.mulf %230, %268 : vector<16x32xf32>
    %c184 = arith.constant 184 : index
    %c0_87 = arith.constant 0 : index
    %270 = vector.load %arg4[%c184, %c0_87] : memref<232x128xf32, #tpu.memory_space<vmem>>, vector<32x24xf32>
    %cst_88 = arith.constant dense<0.000000e+00> : vector<16x24xf32>
    %271 = tpu.matmul %269, %270, %cst_88 {dimension_numbers = #tpu.dot_dimension_numbers<[1], [0], [0], [1], [0, 0, 1, 1], [], []>} : vector<16x32xf32>, vector<32x24xf32>, vector<16x24xf32> -> vector<16x24xf32>
    %272 = arith.addf %199, %271 : vector<16x24xf32>
    %c228 = arith.constant 228 : index
    %c0_89 = arith.constant 0 : index
    %273 = vector.load %arg4[%c228, %c0_89] : memref<232x128xf32, #tpu.memory_space<vmem>>, vector<1x24xf32>
    %274 = vector.broadcast %273 : vector<1x24xf32> to vector<16x24xf32>
    %275 = arith.addf %272, %274 : vector<16x24xf32>
    %276 = tpu.concatenate %198, %275 in 1 : vector<16x8xf32>, vector<16x24xf32> -> vector<16x32xf32>
    %c0_90 = arith.constant 0 : index
    %c0_91 = arith.constant 0 : index
    %277 = vector.load %arg5[%c0_90, %c0_91] : memref<16x32xf32, #tpu.memory_space<vmem>>, vector<16x32xf32>
    tpu.vector_store %arg5[%c0_90, %c0_91], %276 {strides = array<i32>} : memref<16x32xf32, #tpu.memory_space<vmem>>, vector<16x32xf32>,
    return
  }
  func.func @transform_0(%arg0: i32) -> (i32, i32) {
    %c0_i32 = arith.constant 0 : i32
    %c0_i32_0 = arith.constant 0 : i32
    %c0_i32_1 = arith.constant 0 : i32
    return %c0_i32, %c0_i32_0 : i32, i32
  }
  func.func @transform_1(%arg0: i32) -> (i32, i32) {
    %c0_i32 = arith.constant 0 : i32
    %c0_i32_0 = arith.constant 0 : i32
    %c0_i32_1 = arith.constant 0 : i32
    return %c0_i32, %c0_i32_0 : i32, i32
  }
  func.func @transform_2(%arg0: i32) -> (i32, i32) {
    %c0_i32 = arith.constant 0 : i32
    %c0_i32_0 = arith.constant 0 : i32
    %c0_i32_1 = arith.constant 0 : i32
    return %c0_i32, %c0_i32_0 : i32, i32
  }
  func.func @transform_3(%arg0: i32) -> (i32, i32) {
    %c0_i32 = arith.constant 0 : i32
    %c0_i32_0 = arith.constant 0 : i32
    %c0_i32_1 = arith.constant 0 : i32
    return %c0_i32, %c0_i32_0 : i32, i32
  }
  func.func @transform_4(%arg0: i32) -> (i32, i32) {
    %c0_i32 = arith.constant 0 : i32
    %c0_i32_0 = arith.constant 0 : i32
    %c0_i32_1 = arith.constant 0 : i32
    return %c0_i32, %c0_i32_0 : i32, i32
  }
}

</mosaic_0001>

<llo_original>
// kernel: trs_decoder_layer.1
$region0: #{trs_decoder_layer.1}
  #allocation0 [shape = 'u32[]', space=smem, size = 0x4, offset = 0x4, fixed_abs, tag = 'smem constant byte address 0x4 - core index']
  #allocation1 [shape = 'u32[144,128]{1,0:T(1,128)}', space=vmem, size = 0x12000, scoped, tag = 'internal scratch']
  %s0 = inlined_call_operand.hbm [shape: f32[16,8], index: 0, kind: input, shape index: {}]
  %s1 = inlined_call_operand.hbm [shape: f32[16,24], index: 1, kind: input, shape index: {}]
  %s2 = inlined_call_operand.hbm [shape: f32[8,24], index: 2, kind: input, shape index: {}]
  %s3 = inlined_call_operand.hbm [shape: f32[232,128], index: 3, kind: input, shape index: {}]
  %s4 = inlined_call_operand.vmem [shape: f32[16,32], index: 4, kind: output, shape index: {}]
  %s5 = sld [smem:[#allocation0]]
  $region42: #{trs_decoder_layer.1} parent=0
    _
  %s7 = ssub.s32 1, %s5
  %s8 = scalar_select 0, %s7, %s5
  $region1: #{trs_decoder_layer.1} parent=0
    #allocation2 [shape = 'u8[8192]{0}', space=vmem, size = 0x2000, scoped, tag = 'input window, operand 0, single buffered']
    #allocation3 [shape = 's32[1]{0}', space=sflag, size = 0x4, scoped, tag = 'scoped memory for trs_decoder_layer.1']
    #allocation4 [shape = 'u8[8192]{0}', space=vmem, size = 0x2000, scoped, tag = 'input window, operand 1, single buffered']
    #allocation5 [shape = 's32[1]{0}', space=sflag, size = 0x4, scoped, tag = 'scoped memory for trs_decoder_layer.1']
    #allocation6 [shape = 'u8[4096]{0}', space=vmem, size = 0x1000, scoped, tag = 'input window, operand 2, single buffered']
    #allocation7 [shape = 'u8[118784]{0}', space=vmem, size = 0x1d000, scoped, tag = 'input window, operand 3, single buffered']
    #allocation8 [shape = 's32[1]{0}', space=sflag, size = 0x4, scoped, tag = 'scoped memory for trs_decoder_layer.1']
    %9 = vsyncpa [#allocation3], 0
    %10 = vsyncpa [#allocation5], 0
    %11 = vsyncpa [#allocation8], 0
    // Predicated region
    $region2: #{trs_decoder_layer.1} parent=1 // pred_check
      _
    $region3: #{trs_decoder_layer.1} parent=1 // pred_check_branch
      %13 = sbr.rel (0) target = $region5
    $region4: #{trs_decoder_layer.1} parent=1 // pred_region
      %s15 = ssub.s32 256, 256
      %16 = vsyncadd [#allocation3], %s15
      %s17 = sshll.u32 [#allocation2], 4
      %s18 = int_to_ptr.vmem [resolvable:$true] %s17
      %23 = dma.hbm_to_vmem [thread:$0]  %s0, 256, %s18, [#allocation3], 128, 128, 8
    $region5: #{trs_decoder_layer.1} parent=1 // pred_fallthru
      _
    // Predicated region
    $region6: #{trs_decoder_layer.1} parent=1 // pred_check
      _
    $region7: #{trs_decoder_layer.1} parent=1 // pred_check_branch
      %25 = sbr.rel (0) target = $region9
    $region8: #{trs_decoder_layer.1} parent=1 // pred_region
      %s27 = ssub.s32 256, 256
      %28 = vsyncadd [#allocation5], %s27
      %s29 = sshll.u32 [#allocation4], 4
      %s30 = int_to_ptr.vmem [resolvable:$true] %s29
      %35 = dma.hbm_to_vmem [thread:$0]  %s1, 256, %s30, [#allocation5], 128, 128, 8
    $region9: #{trs_decoder_layer.1} parent=1 // pred_fallthru
      _
    // Predicated region
    $region10: #{trs_decoder_layer.1} parent=1 // pred_check
      _
    $region11: #{trs_decoder_layer.1} parent=1 // pred_check_branch
      %37 = sbr.rel (0) target = $region13
    $region12: #{trs_decoder_layer.1} parent=1 // pred_region
      %s39 = ssub.s32 128, 128
      %40 = vsyncadd [#allocation5], %s39
      %s42 = sshll.u32 [#allocation6], 4
      %s43 = int_to_ptr.vmem [resolvable:$true] %s42
      %45 = dma.hbm_to_vmem [thread:$0]  %s2, 128, %s43, [#allocation5]
    $region13: #{trs_decoder_layer.1} parent=1 // pred_fallthru
      _
    // Predicated region
    $region14: #{trs_decoder_layer.1} parent=1 // pred_check
      _
    $region15: #{trs_decoder_layer.1} parent=1 // pred_check_branch
      %47 = sbr.rel (0) target = $region17
    $region16: #{trs_decoder_layer.1} parent=1 // pred_region
      %s49 = ssub.s32 3712, 3712
      %50 = vsyncadd [#allocation8], %s49
      %s51 = sshll.u32 [#allocation7], 4
      %s52 = int_to_ptr.vmem [resolvable:$true] %s51
      %57 = dma.hbm_to_vmem [thread:$0]  %s3, 3712, %s52, [#allocation8], 128, 128, 8
    $region17: #{trs_decoder_layer.1} parent=1 // pred_fallthru
      _
    // Predicated region
    $region18: #{trs_decoder_layer.1} parent=1 // pred_check
      _
    $region19: #{trs_decoder_layer.1} parent=1 // pred_check_branch
      %59 = sbr.rel (0) target = $region21
    $region20: #{trs_decoder_layer.1} parent=1 // pred_region
      %60 = dma.done [#allocation3], 256
    $region21: #{trs_decoder_layer.1} parent=1 // pred_fallthru
      _
    // Predicated region
    $region22: #{trs_decoder_layer.1} parent=1 // pred_check
      _
    $region23: #{trs_decoder_layer.1} parent=1 // pred_check_branch
      %62 = sbr.rel (0) target = $region25
    $region24: #{trs_decoder_layer.1} parent=1 // pred_region
      %63 = dma.done [#allocation5], 256
    $region25: #{trs_decoder_layer.1} parent=1 // pred_fallthru
      _
    // Predicated region
    $region26: #{trs_decoder_layer.1} parent=1 // pred_check
      _
    $region27: #{trs_decoder_layer.1} parent=1 // pred_check_branch
      %65 = sbr.rel (0) target = $region29
    $region28: #{trs_decoder_layer.1} parent=1 // pred_region
      %66 = dma.done [#allocation5], 128
    $region29: #{trs_decoder_layer.1} parent=1 // pred_fallthru
      _
    // Predicated region
    $region30: #{trs_decoder_layer.1} parent=1 // pred_check
      _
    $region31: #{trs_decoder_layer.1} parent=1 // pred_check_branch
      %68 = sbr.rel (0) target = $region33
    $region32: #{trs_decoder_layer.1} parent=1 // pred_region
      %69 = dma.done [#allocation8], 3712
    $region33: #{trs_decoder_layer.1} parent=1 // pred_fallthru
      _
    %v70 = vld [vmem:[#allocation2] sm:$0xff]
    %v71 = vld [vmem:[#allocation2 + $0x8] sm:$0xff]
    %v72 = vld [vmem:[#allocation4] sm:$0xff]
    %v73 = vld [vmem:[#allocation4 + $0x8] sm:$0xff]
    %v74 = vld [vmem:[#allocation6] sm:$0xff]
    %v75 = vld [vmem:[#allocation7 + $0xd8] sm:$0x1]
    %v76 = vld [vmem:[#allocation7 + $0xd9] sm:$0x1]
    %vm77 = vcmask 64512
    %v78 = vsel %vm77, %v70, 0.0
    %79 = vadd.xlane.f32.xlu0 %v78
    %v80 = vpop.xlane.xlu0 %79
    %v81 = vsel %vm77, %v71, 0.0
    %82 = vadd.xlane.f32.xlu0 %v81
    %v83 = vpop.xlane.xlu0 %82
    %v84 = vrcp.pop 8.0
    %v85 = vmul.f32 %v80, %v84
    %v86 = vmul.f32 %v83, %v84
    %v87 = vsub.f32 %v70, %v85
    %v88 = vsub.f32 %v71, %v86
    %v89 = vmul.f32 %v87, %v87
    %v90 = vmul.f32 %v88, %v88
    %v91 = vsel %vm77, %v89, 0.0
    %92 = vadd.xlane.f32.xlu0 %v91
    %v93 = vpop.xlane.xlu0 %92
    %v94 = vsel %vm77, %v90, 0.0
    %95 = vadd.xlane.f32.xlu0 %v94
    %v96 = vpop.xlane.xlu0 %95
    %v97 = vmul.f32 %v93, %v84
    %v98 = vmul.f32 %v96, %v84
    %v99 = vadd.f32 %v97, 1e-05
    %v100 = vadd.f32 %v98, 1e-05
    %v101 = vrsqrt.pop %v99
    %v102 = vrsqrt.pop %v100
    %v103 = vmul.f32 %v87, %v101
    %v104 = vmul.f32 %v88, %v102
    %v105 = vlaneseq
    %v106 = vshrl.u32 %v105, 7
    %v107 = vsub.s32 0, %v106
    %v108 = vrot.slane %v75, %v107
    %v109 = vmul.f32 %v103, %v108
    %v110 = vmul.f32 %v104, %v108
    %v111 = vlaneseq
    %v112 = vshrl.u32 %v111, 7
    %v113 = vsub.s32 0, %v112
    %v114 = vrot.slane %v76, %v113
    %v115 = vadd.f32 %v109, %v114
    %v116 = vadd.f32 %v110, %v114
    %v117 = vld [vmem:[#allocation7 + $0xda] sm:$0x1]
    %v118 = vld [vmem:[#allocation7 + $0xdb] sm:$0x1]
    %vm119 = vcmask 195584
    %v120 = vsel %vm119, %v72, 0.0
    %121 = vadd.xlane.f32.xlu0 %v120
    %v122 = vpop.xlane.xlu0 %121
    %v123 = vsel %vm119, %v73, 0.0
    %124 = vadd.xlane.f32.xlu0 %v123
    %v125 = vpop.xlane.xlu0 %124
    %v126 = vrcp.pop 24.0
    %v127 = vmul.f32 %v122, %v126
    %v128 = vmul.f32 %v125, %v126
    %v129 = vsub.f32 %v72, %v127
    %v130 = vsub.f32 %v73, %v128
    %v131 = vmul.f32 %v129, %v129
    %v132 = vmul.f32 %v130, %v130
    %v133 = vsel %vm119, %v131, 0.0
    %134 = vadd.xlane.f32.xlu0 %v133
    %v135 = vpop.xlane.xlu0 %134
    %v136 = vsel %vm119, %v132, 0.0
    %137 = vadd.xlane.f32.xlu0 %v136
    %v138 = vpop.xlane.xlu0 %137
    %v139 = vmul.f32 %v135, %v126
    %v140 = vmul.f32 %v138, %v126
    %v141 = vadd.f32 %v139, 1e-05
    %v142 = vadd.f32 %v140, 1e-05
    %v143 = vrsqrt.pop %v141
    %v144 = vrsqrt.pop %v142
    %v145 = vmul.f32 %v129, %v143
    %v146 = vmul.f32 %v130, %v144
    %v147 = vlaneseq
    %v148 = vshrl.u32 %v147, 7
    %v149 = vsub.s32 0, %v148
    %v150 = vrot.slane %v117, %v149
    %v151 = vmul.f32 %v145, %v150
    %v152 = vmul.f32 %v146, %v150
    %v153 = vlaneseq
    %v154 = vshrl.u32 %v153, 7
    %v155 = vsub.s32 0, %v154
    %v156 = vrot.slane %v118, %v155
    %v157 = vadd.f32 %v151, %v156
    %v158 = vadd.f32 %v152, %v156
    %161 = vrot.lane.b32.xlu0 %v72, 8
    %v162 = vpop.permute.xlu0 %161
    %163 = vrot.lane.b32.xlu0 %v73, 8
    %v164 = vpop.permute.xlu0 %163
    %v167 = vsel %vm77, %v70, %v162
    %v168 = vsel %vm77, %v71, %v164
    %171 = vrot.lane.b32.xlu0 %v157, 8
    %v172 = vpop.permute.xlu0 %171
    %173 = vrot.lane.b32.xlu0 %v158, 8
    %v174 = vpop.permute.xlu0 %173
    %v177 = vsel %vm77, %v115, %v172
    %v178 = vsel %vm77, %v116, %v174
    %v179 = vlaneseq
    %v180 = vshrl.u32 %v179, 7
    %v181 = vadd.s32 %v180, 8
    %v182 = vcvt.s32.f32 %v180
    %v183 = vcvt.s32.f32 %v181
    %v184 = vlaneseq
    %v185 = vand.u32 %v184, 127
    %v186 = vcvt.s32.f32 %v185
    %v187 = vmul.f32 %v182, 0.5
    %v188 = vmul.f32 %v183, 0.5
    %v189 = vadd.f32 %v187, 1e-06
    %v190 = vadd.f32 %v188, 1e-06
    %v191 = vfloor.f32 %v189
    %v192 = vfloor.f32 %v190
    %vm193 = vcmp.eq.f32.partialorder %v191, %v186
    %vm194 = vcmp.eq.f32.partialorder %v192, %v186
    %v195 = vsel %vm193, 1, 0
    %v196 = vsel %vm194, 1, 0
    %v197 = vcvt.s32.f32 %v195
    %v198 = vcvt.s32.f32 %v196
    %v200 = vsel %vm77, %v197, 0
    %v203 = vsel %vm77, %v198, 0
    %205 = vmatprep.subr.mxu0 0.0
    %206 = vmatpush1.msra.mxu0 0.0
    %207 = vmatprep.subr.mxu0 0.0
    %208 = vmatpush1.msra.mxu0 0.0
    %209 = vmatprep.subr.mxu0 0.0
    %210 = vmatpush1.msra.mxu0 0.0
    %211 = vmatprep.subr.mxu0 0.0
    %212 = vmatpush1.msra.mxu0 0.0
    %213 = vmatprep.subr.mxu0 0.0
    %214 = vmatpush1.msra.mxu0 0.0
    %215 = vmatprep.subr.mxu0 0.0
    %216 = vmatpush1.msra.mxu0 0.0
    %217 = vmatprep.subr.mxu0 0.0
    %218 = vmatpush1.msra.mxu0 0.0
    %219 = vmatprep.subr.mxu0 0.0
    %220 = vmatpush1.msra.mxu0 0.0
    %221 = vmatprep.subr.mxu0 0.0
    %222 = vmatpush1.msra.mxu0 0.0
    %223 = vmatprep.subr.mxu0 0.0
    %224 = vmatpush1.msra.mxu0 0.0
    %225 = vmatprep.subr.mxu0 0.0
    %226 = vmatpush1.msra.mxu0 0.0
    %227 = vmatprep.subr.mxu0 0.0
    %228 = vmatpush1.msra.mxu0 0.0
    %229 = vmatprep.subr.mxu0 0.0
    %230 = vmatpush1.msra.mxu0 0.0
    %231 = vmatprep.subr.mxu0 0.0
    %232 = vmatpush1.msra.mxu0 0.0
    %233 = vmatprep.subr.mxu0 0.0
    %234 = vmatpush1.msra.mxu0 0.0
    %235 = vmatprep.subr.mxu0 0.0
    %236 = vmatpush1.msra.mxu0 %v74
    %237 = vmatprep.subr.mxu0 0.0
    %238 = vmatpush2.msra.mxu0 0.0
    %239 = vmatprep.subr.mxu0 0.0
    %240 = vmatpush2.msra.mxu0 0.0
    %241 = vmatprep.subr.mxu0 0.0
    %242 = vmatpush2.msra.mxu0 0.0
    %243 = vmatprep.subr.mxu0 0.0
    %244 = vmatpush2.msra.mxu0 0.0
    %245 = vmatprep.subr.mxu0 0.0
    %246 = vmatpush2.msra.mxu0 0.0
    %247 = vmatprep.subr.mxu0 0.0
    %248 = vmatpush2.msra.mxu0 0.0
    %249 = vmatprep.subr.mxu0 0.0
    %250 = vmatpush2.msra.mxu0 0.0
    %251 = vmatprep.subr.mxu0 0.0
    %252 = vmatpush2.msra.mxu0 0.0
    %253 = vmatprep.subr.mxu0 0.0
    %254 = vmatpush2.msra.mxu0 0.0
    %255 = vmatprep.subr.mxu0 0.0
    %256 = vmatpush2.msra.mxu0 0.0
    %257 = vmatprep.subr.mxu0 0.0
    %258 = vmatpush2.msra.mxu0 0.0
    %259 = vmatprep.subr.mxu0 0.0
    %260 = vmatpush2.msra.mxu0 0.0
    %261 = vmatprep.subr.mxu0 0.0
    %262 = vmatpush2.msra.mxu0 0.0
    %263 = vmatprep.subr.mxu0 0.0
    %264 = vmatpush2.msra.mxu0 0.0
    %265 = vmatprep.subr.mxu0 0.0
    %266 = vmatpush2.msra.mxu0 0.0
    %267 = vmatprep.subr.mxu0 0.0
    %268 = vmatpush2.msra.mxu0 0.0
    %269 = vmatprep.mubr.f32.mxu0 0.0
    %270 = vmatmul.mubr.f32.gmra.mxu0 %v200
    %v271 = vpop.f32.mrf.mxu0
    %v272 = vadd.f32 0.0, %v271
    %v273 = vpop.f32.mrf.mxu0
    %274 = vmatprep.mubr.f32.mxu0 0.0
    %275 = vmatmul.mubr.f32.gmra.mxu0 %v203
    %v276 = vpop.f32.mrf.mxu0
    %v277 = vadd.f32 0.0, %v276
    %v278 = vpop.f32.mrf.mxu0
    %279 = vdwg.mxu0
    %v280 = vadd.s32 %v180, 16
    %v281 = vadd.s32 %v180, 24
    %v282 = vadd.s32 %v180, 32
    %v283 = vadd.s32 %v180, 40
    %v284 = vadd.s32 %v180, 48
    %v285 = vadd.s32 %v180, 56
    %v286 = vcvt.s32.f32 %v280
    %v287 = vcvt.s32.f32 %v281
    %v288 = vcvt.s32.f32 %v282
    %v289 = vcvt.s32.f32 %v283
    %v290 = vcvt.s32.f32 %v284
    %v291 = vcvt.s32.f32 %v285
    %v292 = vmul.f32 %v182, 0.0625
    %v293 = vmul.f32 %v183, 0.0625
    %v294 = vmul.f32 %v286, 0.0625
    %v295 = vmul.f32 %v287, 0.0625
    %v296 = vmul.f32 %v288, 0.0625
    %v297 = vmul.f32 %v289, 0.0625
    %v298 = vmul.f32 %v290, 0.0625
    %v299 = vmul.f32 %v291, 0.0625
    %v300 = vadd.f32 %v292, 1e-06
    %v301 = vadd.f32 %v293, 1e-06
    %v302 = vadd.f32 %v294, 1e-06
    %v303 = vadd.f32 %v295, 1e-06
    %v304 = vadd.f32 %v296, 1e-06
    %v305 = vadd.f32 %v297, 1e-06
    %v306 = vadd.f32 %v298, 1e-06
    %v307 = vadd.f32 %v299, 1e-06
    %v308 = vfloor.f32 %v300
    %v309 = vfloor.f32 %v301
    %v310 = vfloor.f32 %v302
    %v311 = vfloor.f32 %v303
    %v312 = vfloor.f32 %v304
    %v313 = vfloor.f32 %v305
    %v314 = vfloor.f32 %v306
    %v315 = vfloor.f32 %v307
    %v316 = vmul.f32 %v186, 0.125
    %v317 = vadd.f32 %v316, 1e-06
    %v318 = vfloor.f32 %v317
    %vm319 = vcmp.eq.f32.partialorder %v308, %v318
    %vm320 = vcmp.eq.f32.partialorder %v309, %v318
    %vm321 = vcmp.eq.f32.partialorder %v310, %v318
    %vm322 = vcmp.eq.f32.partialorder %v311, %v318
    %vm323 = vcmp.eq.f32.partialorder %v312, %v318
    %vm324 = vcmp.eq.f32.partialorder %v313, %v318
    %vm325 = vcmp.eq.f32.partialorder %v314, %v318
    %vm326 = vcmp.eq.f32.partialorder %v315, %v318
    %v327 = vsel %vm319, 1, 0
    %v328 = vsel %vm320, 1, 0
    %v329 = vsel %vm321, 1, 0
    %v330 = vsel %vm322, 1, 0
    %v331 = vsel %vm323, 1, 0
    %v332 = vsel %vm324, 1, 0
    %v333 = vsel %vm325, 1, 0
    %v334 = vsel %vm326, 1, 0
    %v335 = vcvt.s32.f32 %v327
    %v336 = vcvt.s32.f32 %v328
    %v337 = vcvt.s32.f32 %v329
    %v338 = vcvt.s32.f32 %v330
    %v339 = vcvt.s32.f32 %v331
    %v340 = vcvt.s32.f32 %v332
    %v341 = vcvt.s32.f32 %v333
    %v342 = vcvt.s32.f32 %v334
    %v343 = vmul.f32 %v286, 0.5
    %v344 = vmul.f32 %v287, 0.5
    %v345 = vmul.f32 %v288, 0.5
    %v346 = vmul.f32 %v289, 0.5
    %v347 = vmul.f32 %v290, 0.5
    %v348 = vmul.f32 %v291, 0.5
    %v349 = vadd.f32 %v343, 1e-06
    %v350 = vadd.f32 %v344, 1e-06
    %v351 = vadd.f32 %v345, 1e-06
    %v352 = vadd.f32 %v346, 1e-06
    %v353 = vadd.f32 %v347, 1e-06
    %v354 = vadd.f32 %v348, 1e-06
    %v355 = vfloor.f32 %v349
    %v356 = vfloor.f32 %v350
    %v357 = vfloor.f32 %v351
    %v358 = vfloor.f32 %v352
    %v359 = vfloor.f32 %v353
    %v360 = vfloor.f32 %v354
    %v361 = vmul.f32 %v191, 2.0
    %v362 = vmul.f32 %v192, 2.0
    %v363 = vmul.f32 %v355, 2.0
    %v364 = vmul.f32 %v356, 2.0
    %v365 = vmul.f32 %v357, 2.0
    %v366 = vmul.f32 %v358, 2.0
    %v367 = vmul.f32 %v359, 2.0
    %v368 = vmul.f32 %v360, 2.0
    %v369 = vsub.f32 %v182, %v361
    %v370 = vsub.f32 %v183, %v362
    %v371 = vsub.f32 %v286, %v363
    %v372 = vsub.f32 %v287, %v364
    %v373 = vsub.f32 %v288, %v365
    %v374 = vsub.f32 %v289, %v366
    %v375 = vsub.f32 %v290, %v367
    %v376 = vsub.f32 %v291, %v368
    %v377 = vmul.f32 %v186, 0.5
    %v378 = vadd.f32 %v377, 1e-06
    %v379 = vfloor.f32 %v378
    %v380 = vmul.f32 %v379, 2.0
    %v381 = vsub.f32 %v186, %v380
    %vm382 = vcmp.eq.f32.partialorder %v369, %v381
    %vm383 = vcmp.eq.f32.partialorder %v370, %v381
    %vm384 = vcmp.eq.f32.partialorder %v371, %v381
    %vm385 = vcmp.eq.f32.partialorder %v372, %v381
    %vm386 = vcmp.eq.f32.partialorder %v373, %v381
    %vm387 = vcmp.eq.f32.partialorder %v374, %v381
    %vm388 = vcmp.eq.f32.partialorder %v375, %v381
    %vm389 = vcmp.eq.f32.partialorder %v376, %v381
    %v390 = vsel %vm382, 0.0, -1e+30
    %v391 = vsel %vm383, 0.0, -1e+30
    %v392 = vsel %vm384, 0.0, -1e+30
    %v393 = vsel %vm385, 0.0, -1e+30
    %v394 = vsel %vm386, 0.0, -1e+30
    %v395 = vsel %vm387, 0.0, -1e+30
    %v396 = vsel %vm388, 0.0, -1e+30
    %v397 = vsel %vm389, 0.0, -1e+30
    %v398 = vld [vmem:[#allocation7] sm:$0xff]
    %v399 = vld [vmem:[#allocation7 + $0x8] sm:$0xff]
    %v400 = vld [vmem:[#allocation7 + $0x10] sm:$0xff]
    %v401 = vld [vmem:[#allocation7 + $0x18] sm:$0xff]
    %v402 = vld [vmem:[#allocation7 + $0xdc] sm:$0x1]
    %v403 = vlaneseq
    %v404 = vshrl.u32 %v403, 7
    %v405 = vsub.s32 0, %v404
    %v406 = vrot.slane %v402, %v405
    %vm407 = vcmask 261120
    %v409 = vsel %vm407, %v177, 0
    %v412 = vsel %vm407, %v178, 0
    %414 = vmatprep.subr.mxu0 0.0
    %415 = vmatpush1.msra.mxu0 0.0
    %416 = vmatprep.subr.mxu0 0.0
    %417 = vmatpush1.msra.mxu0 0.0
    %418 = vmatprep.subr.mxu0 0.0
    %419 = vmatpush1.msra.mxu0 0.0
    %420 = vmatprep.subr.mxu0 0.0
    %421 = vmatpush1.msra.mxu0 0.0
    %422 = vmatprep.subr.mxu0 0.0
    %423 = vmatpush1.msra.mxu0 0.0
    %424 = vmatprep.subr.mxu0 0.0
    %425 = vmatpush1.msra.mxu0 0.0
    %426 = vmatprep.subr.mxu0 0.0
    %427 = vmatpush1.msra.mxu0 0.0
    %428 = vmatprep.subr.mxu0 0.0
    %429 = vmatpush1.msra.mxu0 0.0
    %430 = vmatprep.subr.mxu0 0.0
    %431 = vmatpush1.msra.mxu0 0.0
    %432 = vmatprep.subr.mxu0 0.0
    %433 = vmatpush1.msra.mxu0 0.0
    %434 = vmatprep.subr.mxu0 0.0
    %435 = vmatpush1.msra.mxu0 0.0
    %436 = vmatprep.subr.mxu0 0.0
    %437 = vmatpush1.msra.mxu0 0.0
    %438 = vmatprep.subr.mxu0 0.0
    %439 = vmatpush1.msra.mxu0 %v401
    %440 = vmatprep.subr.mxu0 0.0
    %441 = vmatpush1.msra.mxu0 %v400
    %442 = vmatprep.subr.mxu0 0.0
    %443 = vmatpush1.msra.mxu0 %v399
    %444 = vmatprep.subr.mxu0 0.0
    %445 = vmatpush1.msra.mxu0 %v398
    %446 = vmatprep.subr.mxu0 0.0
    %447 = vmatpush2.msra.mxu0 0.0
    %448 = vmatprep.subr.mxu0 0.0
    %449 = vmatpush2.msra.mxu0 0.0
    %450 = vmatprep.subr.mxu0 0.0
    %451 = vmatpush2.msra.mxu0 0.0
    %452 = vmatprep.subr.mxu0 0.0
    %453 = vmatpush2.msra.mxu0 0.0
    %454 = vmatprep.subr.mxu0 0.0
    %455 = vmatpush2.msra.mxu0 0.0
    %456 = vmatprep.subr.mxu0 0.0
    %457 = vmatpush2.msra.mxu0 0.0
    %458 = vmatprep.subr.mxu0 0.0
    %459 = vmatpush2.msra.mxu0 0.0
    %460 = vmatprep.subr.mxu0 0.0
    %461 = vmatpush2.msra.mxu0 0.0
    %462 = vmatprep.subr.mxu0 0.0
    %463 = vmatpush2.msra.mxu0 0.0
    %464 = vmatprep.subr.mxu0 0.0
    %465 = vmatpush2.msra.mxu0 0.0
    %466 = vmatprep.subr.mxu0 0.0
    %467 = vmatpush2.msra.mxu0 0.0
    %468 = vmatprep.subr.mxu0 0.0
    %469 = vmatpush2.msra.mxu0 0.0
    %470 = vmatprep.subr.mxu0 0.0
    %471 = vmatpush2.msra.mxu0 0.0
    %472 = vmatprep.subr.mxu0 0.0
    %473 = vmatpush2.msra.mxu0 0.0
    %474 = vmatprep.subr.mxu0 0.0
    %475 = vmatpush2.msra.mxu0 0.0
    %476 = vmatprep.subr.mxu0 0.0
    %477 = vmatpush2.msra.mxu0 0.0
    %478 = vmatprep.mubr.f32.mxu0 0.0
    %479 = vmatmul.mubr.f32.gmra.mxu0 %v409
    %v480 = vpop.f32.mrf.mxu0
    %v481 = vadd.f32 %v406, %v480
    %v482 = vpop.f32.mrf.mxu0
    %483 = vmatprep.mubr.f32.mxu0 0.0
    %484 = vmatmul.mubr.f32.gmra.mxu0 %v412
    %v485 = vpop.f32.mrf.mxu0
    %v486 = vadd.f32 %v406, %v485
    %v487 = vpop.f32.mrf.mxu0
    %488 = vdwg.mxu0
    %v489 = vmul.f32 %v481, 0.35355338
    %v490 = vmul.f32 %v486, 0.35355338
    %v491 = vmul.f32 %v489, %v335
    %v492 = vmul.f32 %v490, %v336
    %v493 = vmul.f32 %v489, %v337
    %v494 = vmul.f32 %v490, %v338
    %v495 = vmul.f32 %v489, %v339
    %v496 = vmul.f32 %v490, %v340
    %v497 = vmul.f32 %v489, %v341
    %v498 = vmul.f32 %v490, %v342
    %501 = vrot.lane.b32.xlu0 %v481, 96
    %v502 = vpop.permute.xlu0 %501
    %503 = vrot.lane.b32.xlu0 %v486, 96
    %v504 = vpop.permute.xlu0 %503
    %v506 = vsel %vm407, %v491, 0
    %v509 = vsel %vm407, %v492, 0
    %v512 = vsel %vm407, %v493, 0
    %v515 = vsel %vm407, %v494, 0
    %v518 = vsel %vm407, %v495, 0
    %v521 = vsel %vm407, %v496, 0
    %v524 = vsel %vm407, %v497, 0
    %v527 = vsel %vm407, %v498, 0
    %v529 = vsel %vm407, %v502, 0
    %v531 = vsel %vm407, %v504, 0
    %533 = vmatprep.subr.mxu0 0.0
    %534 = vmatpush1.xpose.msra.mxu0 0.0
    %535 = vmatprep.subr.mxu0 0.0
    %536 = vmatpush1.xpose.msra.mxu0 0.0
    %537 = vmatprep.subr.mxu0 0.0
    %538 = vmatpush1.xpose.msra.mxu0 0.0
    %539 = vmatprep.subr.mxu0 0.0
    %540 = vmatpush1.xpose.msra.mxu0 0.0
    %541 = vmatprep.subr.mxu0 0.0
    %542 = vmatpush1.xpose.msra.mxu0 0.0
    %543 = vmatprep.subr.mxu0 0.0
    %544 = vmatpush1.xpose.msra.mxu0 0.0
    %545 = vmatprep.subr.mxu0 0.0
    %546 = vmatpush1.xpose.msra.mxu0 0.0
    %547 = vmatprep.subr.mxu0 0.0
    %548 = vmatpush1.xpose.msra.mxu0 0.0
    %549 = vmatprep.subr.mxu0 0.0
    %550 = vmatpush1.xpose.msra.mxu0 0.0
    %551 = vmatprep.subr.mxu0 0.0
    %552 = vmatpush1.xpose.msra.mxu0 0.0
    %553 = vmatprep.subr.mxu0 0.0
    %554 = vmatpush1.xpose.msra.mxu0 0.0
    %555 = vmatprep.subr.mxu0 0.0
    %556 = vmatpush1.xpose.msra.mxu0 0.0
    %557 = vmatprep.subr.mxu0 0.0
    %558 = vmatpush1.xpose.msra.mxu0 0.0
    %559 = vmatprep.subr.mxu0 0.0
    %560 = vmatpush1.xpose.msra.mxu0 0.0
    %561 = vmatprep.subr.mxu0 0.0
    %562 = vmatpush1.xpose.msra.mxu0 %v531
    %563 = vmatprep.subr.mxu0 0.0
    %564 = vmatpush1.xpose.msra.mxu0 %v529
    %565 = vmatprep.subr.mxu0 0.0
    %566 = vmatpush2.xpose.msra.mxu0 0.0
    %567 = vmatprep.subr.mxu0 0.0
    %568 = vmatpush2.xpose.msra.mxu0 0.0
    %569 = vmatprep.subr.mxu0 0.0
    %570 = vmatpush2.xpose.msra.mxu0 0.0
    %571 = vmatprep.subr.mxu0 0.0
    %572 = vmatpush2.xpose.msra.mxu0 0.0
    %573 = vmatprep.subr.mxu0 0.0
    %574 = vmatpush2.xpose.msra.mxu0 0.0
    %575 = vmatprep.subr.mxu0 0.0
    %576 = vmatpush2.xpose.msra.mxu0 0.0
    %577 = vmatprep.subr.mxu0 0.0
    %578 = vmatpush2.xpose.msra.mxu0 0.0
    %579 = vmatprep.subr.mxu0 0.0
    %580 = vmatpush2.xpose.msra.mxu0 0.0
    %581 = vmatprep.subr.mxu0 0.0
    %582 = vmatpush2.xpose.msra.mxu0 0.0
    %583 = vmatprep.subr.mxu0 0.0
    %584 = vmatpush2.xpose.msra.mxu0 0.0
    %585 = vmatprep.subr.mxu0 0.0
    %586 = vmatpush2.xpose.msra.mxu0 0.0
    %587 = vmatprep.subr.mxu0 0.0
    %588 = vmatpush2.xpose.msra.mxu0 0.0
    %589 = vmatprep.subr.mxu0 0.0
    %590 = vmatpush2.xpose.msra.mxu0 0.0
    %591 = vmatprep.subr.mxu0 0.0
    %592 = vmatpush2.xpose.msra.mxu0 0.0
    %593 = vmatprep.subr.mxu0 0.0
    %594 = vmatpush2.xpose.msra.mxu0 0.0
    %595 = vmatprep.subr.mxu0 0.0
    %596 = vmatpush2.xpose.msra.mxu0 0.0
    %597 = vmatprep.mubr.f32.mxu0 0.0
    %598 = vmatmul.mubr.f32.gmra.mxu0 %v506
    %v599 = vpop.f32.mrf.mxu0
    %v600 = vadd.f32 %v390, %v599
    %v601 = vpop.f32.mrf.mxu0
    %602 = vmatprep.mubr.f32.mxu0 0.0
    %603 = vmatmul.mubr.f32.gmra.mxu0 %v509
    %v604 = vpop.f32.mrf.mxu0
    %v605 = vadd.f32 %v391, %v604
    %v606 = vpop.f32.mrf.mxu0
    %607 = vmatprep.mubr.f32.mxu0 0.0
    %608 = vmatmul.mubr.f32.gmra.mxu0 %v512
    %v609 = vpop.f32.mrf.mxu0
    %v610 = vadd.f32 %v392, %v609
    %v611 = vpop.f32.mrf.mxu0
    %612 = vmatprep.mubr.f32.mxu0 0.0
    %613 = vmatmul.mubr.f32.gmra.mxu0 %v515
    %v614 = vpop.f32.mrf.mxu0
    %v615 = vadd.f32 %v393, %v614
    %v616 = vpop.f32.mrf.mxu0
    %617 = vmatprep.mubr.f32.mxu0 0.0
    %618 = vmatmul.mubr.f32.gmra.mxu0 %v518
    %v619 = vpop.f32.mrf.mxu0
    %v620 = vadd.f32 %v394, %v619
    %v621 = vpop.f32.mrf.mxu0
    %622 = vmatprep.mubr.f32.mxu0 0.0
    %623 = vmatmul.mubr.f32.gmra.mxu0 %v521
    %v624 = vpop.f32.mrf.mxu0
    %v625 = vadd.f32 %v395, %v624
    %v626 = vpop.f32.mrf.mxu0
    %627 = vmatprep.mubr.f32.mxu0 0.0
    %628 = vmatmul.mubr.f32.gmra.mxu0 %v524
    %v629 = vpop.f32.mrf.mxu0
    %v630 = vadd.f32 %v396, %v629
    %v631 = vpop.f32.mrf.mxu0
    %632 = vmatprep.mubr.f32.mxu0 0.0
    %633 = vmatmul.mubr.f32.gmra.mxu0 %v527
    %v634 = vpop.f32.mrf.mxu0
    %v635 = vadd.f32 %v397, %v634
    %v636 = vpop.f32.mrf.mxu0
    %637 = vdwg.mxu0
    %vm638 = vcmask 130048
    %v639 = vsel %vm638, %v600, -inf
    %640 = vmax.xlane.f32.xlu0 %v639
    %v641 = vpop.xlane.xlu0 %640
    %v642 = vsel %vm638, %v605, -inf
    %643 = vmax.xlane.f32.xlu0 %v642
    %v644 = vpop.xlane.xlu0 %643
    %v645 = vsel %vm638, %v610, -inf
    %646 = vmax.xlane.f32.xlu0 %v645
    %v647 = vpop.xlane.xlu0 %646
    %v648 = vsel %vm638, %v615, -inf
    %649 = vmax.xlane.f32.xlu0 %v648
    %v650 = vpop.xlane.xlu0 %649
    %v651 = vsel %vm638, %v620, -inf
    %652 = vmax.xlane.f32.xlu0 %v651
    %v653 = vpop.xlane.xlu0 %652
    %v654 = vsel %vm638, %v625, -inf
    %655 = vmax.xlane.f32.xlu0 %v654
    %v656 = vpop.xlane.xlu0 %655
    %v657 = vsel %vm638, %v630, -inf
    %658 = vmax.xlane.f32.xlu0 %v657
    %v659 = vpop.xlane.xlu0 %658
    %v660 = vsel %vm638, %v635, -inf
    %661 = vmax.xlane.f32.xlu0 %v660
    %v662 = vpop.xlane.xlu0 %661
    %v663 = vsub.f32 %v600, %v641
    %v664 = vsub.f32 %v605, %v644
    %v665 = vsub.f32 %v610, %v647
    %v666 = vsub.f32 %v615, %v650
    %v667 = vsub.f32 %v620, %v653
    %v668 = vsub.f32 %v625, %v656
    %v669 = vsub.f32 %v630, %v659
    %v670 = vsub.f32 %v635, %v662
    %v671 = vmul.f32 %v663, 1.442695
    %v672 = vpow.pop %v671
    %v673 = vmul.f32 %v664, 1.442695
    %v674 = vpow.pop %v673
    %v675 = vmul.f32 %v665, 1.442695
    %v676 = vpow.pop %v675
    %v677 = vmul.f32 %v666, 1.442695
    %v678 = vpow.pop %v677
    %v679 = vmul.f32 %v667, 1.442695
    %v680 = vpow.pop %v679
    %v681 = vmul.f32 %v668, 1.442695
    %v682 = vpow.pop %v681
    %v683 = vmul.f32 %v669, 1.442695
    %v684 = vpow.pop %v683
    %v685 = vmul.f32 %v670, 1.442695
    %v686 = vpow.pop %v685
    %v687 = vsel %vm638, %v672, 0.0
    %688 = vadd.xlane.f32.xlu0 %v687
    %v689 = vpop.xlane.xlu0 %688
    %v690 = vsel %vm638, %v674, 0.0
    %691 = vadd.xlane.f32.xlu0 %v690
    %v692 = vpop.xlane.xlu0 %691
    %v693 = vsel %vm638, %v676, 0.0
    %694 = vadd.xlane.f32.xlu0 %v693
    %v695 = vpop.xlane.xlu0 %694
    %v696 = vsel %vm638, %v678, 0.0
    %697 = vadd.xlane.f32.xlu0 %v696
    %v698 = vpop.xlane.xlu0 %697
    %v699 = vsel %vm638, %v680, 0.0
    %700 = vadd.xlane.f32.xlu0 %v699
    %v701 = vpop.xlane.xlu0 %700
    %v702 = vsel %vm638, %v682, 0.0
    %703 = vadd.xlane.f32.xlu0 %v702
    %v704 = vpop.xlane.xlu0 %703
    %v705 = vsel %vm638, %v684, 0.0
    %706 = vadd.xlane.f32.xlu0 %v705
    %v707 = vpop.xlane.xlu0 %706
    %v708 = vsel %vm638, %v686, 0.0
    %709 = vadd.xlane.f32.xlu0 %v708
    %v710 = vpop.xlane.xlu0 %709
    %v711 = vrcp.pop %v689
    %v712 = vrcp.pop %v692
    %v713 = vrcp.pop %v695
    %v714 = vrcp.pop %v698
    %v715 = vrcp.pop %v701
    %v716 = vrcp.pop %v704
    %v717 = vrcp.pop %v707
    %v718 = vrcp.pop %v710
    %v719 = vmul.f32 %v689, %v711
    %v720 = vmul.f32 %v692, %v712
    %v721 = vmul.f32 %v695, %v713
    %v722 = vmul.f32 %v698, %v714
    %v723 = vmul.f32 %v701, %v715
    %v724 = vmul.f32 %v704, %v716
    %v725 = vmul.f32 %v707, %v717
    %v726 = vmul.f32 %v710, %v718
    %v727 = vsub.f32 2.0, %v719
    %v728 = vsub.f32 2.0, %v720
    %v729 = vsub.f32 2.0, %v721
    %v730 = vsub.f32 2.0, %v722
    %v731 = vsub.f32 2.0, %v723
    %v732 = vsub.f32 2.0, %v724
    %v733 = vsub.f32 2.0, %v725
    %v734 = vsub.f32 2.0, %v726
    %v735 = vmul.f32 %v711, %v727
    %v736 = vmul.f32 %v712, %v728
    %v737 = vmul.f32 %v713, %v729
    %v738 = vmul.f32 %v714, %v730
    %v739 = vmul.f32 %v715, %v731
    %v740 = vmul.f32 %v716, %v732
    %v741 = vmul.f32 %v717, %v733
    %v742 = vmul.f32 %v718, %v734
    %v743 = vmul.f32 %v672, %v735
    %v744 = vmul.f32 %v674, %v736
    %v745 = vmul.f32 %v676, %v737
    %v746 = vmul.f32 %v678, %v738
    %v747 = vmul.f32 %v680, %v739
    %v748 = vmul.f32 %v682, %v740
    %v749 = vmul.f32 %v684, %v741
    %v750 = vmul.f32 %v686, %v742
    %751 = vrot.lane.b32.xlu0 %v481, 64
    %v752 = vpop.permute.xlu0 %751
    %753 = vrot.lane.b32.xlu0 %v486, 64
    %v754 = vpop.permute.xlu0 %753
    %v758 = vsel %vm638, %v743, 0
    %v761 = vsel %vm638, %v744, 0
    %v764 = vsel %vm638, %v745, 0
    %v767 = vsel %vm638, %v746, 0
    %v770 = vsel %vm638, %v747, 0
    %v773 = vsel %vm638, %v748, 0
    %v776 = vsel %vm638, %v749, 0
    %v779 = vsel %vm638, %v750, 0
    %781 = vmatprep.subr.mxu0 0.0
    %782 = vmatpush1.msra.mxu0 0.0
    %783 = vmatprep.subr.mxu0 0.0
    %784 = vmatpush1.msra.mxu0 0.0
    %785 = vmatprep.subr.mxu0 0.0
    %786 = vmatpush1.msra.mxu0 0.0
    %787 = vmatprep.subr.mxu0 0.0
    %788 = vmatpush1.msra.mxu0 0.0
    %789 = vmatprep.subr.mxu0 0.0
    %790 = vmatpush1.msra.mxu0 0.0
    %791 = vmatprep.subr.mxu0 0.0
    %792 = vmatpush1.msra.mxu0 0.0
    %793 = vmatprep.subr.mxu0 0.0
    %794 = vmatpush1.msra.mxu0 0.0
    %795 = vmatprep.subr.mxu0 0.0
    %796 = vmatpush1.msra.mxu0 0.0
    %797 = vmatprep.subr.mxu0 0.0
    %798 = vmatpush1.msra.mxu0 0.0
    %799 = vmatprep.subr.mxu0 0.0
    %800 = vmatpush1.msra.mxu0 0.0
    %801 = vmatprep.subr.mxu0 0.0
    %802 = vmatpush1.msra.mxu0 0.0
    %803 = vmatprep.subr.mxu0 0.0
    %804 = vmatpush1.msra.mxu0 0.0
    %805 = vmatprep.subr.mxu0 0.0
    %806 = vmatpush1.msra.mxu0 0.0
    %807 = vmatprep.subr.mxu0 0.0
    %808 = vmatpush1.msra.mxu0 0.0
    %809 = vmatprep.subr.mxu0 0.0
    %810 = vmatpush1.msra.mxu0 %v754
    %811 = vmatprep.subr.mxu0 0.0
    %812 = vmatpush1.msra.mxu0 %v752
    %813 = vmatprep.subr.mxu0 0.0
    %814 = vmatpush2.msra.mxu0 0.0
    %815 = vmatprep.subr.mxu0 0.0
    %816 = vmatpush2.msra.mxu0 0.0
    %817 = vmatprep.subr.mxu0 0.0
    %818 = vmatpush2.msra.mxu0 0.0
    %819 = vmatprep.subr.mxu0 0.0
    %820 = vmatpush2.msra.mxu0 0.0
    %821 = vmatprep.subr.mxu0 0.0
    %822 = vmatpush2.msra.mxu0 0.0
    %823 = vmatprep.subr.mxu0 0.0
    %824 = vmatpush2.msra.mxu0 0.0
    %825 = vmatprep.subr.mxu0 0.0
    %826 = vmatpush2.msra.mxu0 0.0
    %827 = vmatprep.subr.mxu0 0.0
    %828 = vmatpush2.msra.mxu0 0.0
    %829 = vmatprep.subr.mxu0 0.0
    %830 = vmatpush2.msra.mxu0 0.0
    %831 = vmatprep.subr.mxu0 0.0
    %832 = vmatpush2.msra.mxu0 0.0
    %833 = vmatprep.subr.mxu0 0.0
    %834 = vmatpush2.msra.mxu0 0.0
    %835 = vmatprep.subr.mxu0 0.0
    %836 = vmatpush2.msra.mxu0 0.0
    %837 = vmatprep.subr.mxu0 0.0
    %838 = vmatpush2.msra.mxu0 0.0
    %839 = vmatprep.subr.mxu0 0.0
    %840 = vmatpush2.msra.mxu0 0.0
    %841 = vmatprep.subr.mxu0 0.0
    %842 = vmatpush2.msra.mxu0 0.0
    %843 = vmatprep.subr.mxu0 0.0
    %844 = vmatpush2.msra.mxu0 0.0
    %845 = vmatprep.mubr.f32.mxu0 0.0
    %846 = vmatmul.mubr.f32.gmra.mxu0 %v758
    %v847 = vpop.f32.mrf.mxu0
    %v848 = vadd.f32 0.0, %v847
    %v849 = vpop.f32.mrf.mxu0
    %850 = vmatprep.mubr.f32.mxu0 0.0
    %851 = vmatmul.mubr.f32.gmra.mxu0 %v761
    %v852 = vpop.f32.mrf.mxu0
    %v853 = vadd.f32 0.0, %v852
    %v854 = vpop.f32.mrf.mxu0
    %855 = vmatprep.mubr.f32.mxu0 0.0
    %856 = vmatmul.mubr.f32.gmra.mxu0 %v764
    %v857 = vpop.f32.mrf.mxu0
    %v858 = vadd.f32 0.0, %v857
    %v859 = vpop.f32.mrf.mxu0
    %860 = vmatprep.mubr.f32.mxu0 0.0
    %861 = vmatmul.mubr.f32.gmra.mxu0 %v767
    %v862 = vpop.f32.mrf.mxu0
    %v863 = vadd.f32 0.0, %v862
    %v864 = vpop.f32.mrf.mxu0
    %865 = vmatprep.mubr.f32.mxu0 0.0
    %866 = vmatmul.mubr.f32.gmra.mxu0 %v770
    %v867 = vpop.f32.mrf.mxu0
    %v868 = vadd.f32 0.0, %v867
    %v869 = vpop.f32.mrf.mxu0
    %870 = vmatprep.mubr.f32.mxu0 0.0
    %871 = vmatmul.mubr.f32.gmra.mxu0 %v773
    %v872 = vpop.f32.mrf.mxu0
    %v873 = vadd.f32 0.0, %v872
    %v874 = vpop.f32.mrf.mxu0
    %875 = vmatprep.mubr.f32.mxu0 0.0
    %876 = vmatmul.mubr.f32.gmra.mxu0 %v776
    %v877 = vpop.f32.mrf.mxu0
    %v878 = vadd.f32 0.0, %v877
    %v879 = vpop.f32.mrf.mxu0
    %880 = vmatprep.mubr.f32.mxu0 0.0
    %881 = vmatmul.mubr.f32.gmra.mxu0 %v779
    %v882 = vpop.f32.mrf.mxu0
    %v883 = vadd.f32 0.0, %v882
    %v884 = vpop.f32.mrf.mxu0
    %885 = vdwg.mxu0
    %v886 = vmul.f32 %v848, %v335
    %v887 = vmul.f32 %v853, %v336
    %v888 = vmul.f32 %v858, %v337
    %v889 = vmul.f32 %v863, %v338
    %v890 = vmul.f32 %v868, %v339
    %v891 = vmul.f32 %v873, %v340
    %v892 = vmul.f32 %v878, %v341
    %v893 = vmul.f32 %v883, %v342
    %v894 = vadd.f32 %v886, %v888
    %v895 = vadd.f32 %v887, %v889
    %v896 = vadd.f32 %v894, %v890
    %v897 = vadd.f32 %v895, %v891
    %v898 = vadd.f32 %v896, %v892
    %v899 = vadd.f32 %v897, %v893
    %v900 = vld [vmem:[#allocation7 + $0x20] sm:$0xff]
    %v901 = vld [vmem:[#allocation7 + $0x28] sm:$0xff]
    %v902 = vld [vmem:[#allocation7 + $0x30] sm:$0xff]
    %v903 = vld [vmem:[#allocation7 + $0x38] sm:$0xff]
    %v905 = vsel %vm407, %v898, 0
    %v908 = vsel %vm407, %v899, 0
    %910 = vmatprep.subr.mxu0 0.0
    %911 = vmatpush1.msra.mxu0 0.0
    %912 = vmatprep.subr.mxu0 0.0
    %913 = vmatpush1.msra.mxu0 0.0
    %914 = vmatprep.subr.mxu0 0.0
    %915 = vmatpush1.msra.mxu0 0.0
    %916 = vmatprep.subr.mxu0 0.0
    %917 = vmatpush1.msra.mxu0 0.0
    %918 = vmatprep.subr.mxu0 0.0
    %919 = vmatpush1.msra.mxu0 0.0
    %920 = vmatprep.subr.mxu0 0.0
    %921 = vmatpush1.msra.mxu0 0.0
    %922 = vmatprep.subr.mxu0 0.0
    %923 = vmatpush1.msra.mxu0 0.0
    %924 = vmatprep.subr.mxu0 0.0
    %925 = vmatpush1.msra.mxu0 0.0
    %926 = vmatprep.subr.mxu0 0.0
    %927 = vmatpush1.msra.mxu0 0.0
    %928 = vmatprep.subr.mxu0 0.0
    %929 = vmatpush1.msra.mxu0 0.0
    %930 = vmatprep.subr.mxu0 0.0
    %931 = vmatpush1.msra.mxu0 0.0
    %932 = vmatprep.subr.mxu0 0.0
    %933 = vmatpush1.msra.mxu0 0.0
    %934 = vmatprep.subr.mxu0 0.0
    %935 = vmatpush1.msra.mxu0 %v903
    %936 = vmatprep.subr.mxu0 0.0
    %937 = vmatpush1.msra.mxu0 %v902
    %938 = vmatprep.subr.mxu0 0.0
    %939 = vmatpush1.msra.mxu0 %v901
    %940 = vmatprep.subr.mxu0 0.0
    %941 = vmatpush1.msra.mxu0 %v900
    %942 = vmatprep.subr.mxu0 0.0
    %943 = vmatpush2.msra.mxu0 0.0
    %944 = vmatprep.subr.mxu0 0.0
    %945 = vmatpush2.msra.mxu0 0.0
    %946 = vmatprep.subr.mxu0 0.0
    %947 = vmatpush2.msra.mxu0 0.0
    %948 = vmatprep.subr.mxu0 0.0
    %949 = vmatpush2.msra.mxu0 0.0
    %950 = vmatprep.subr.mxu0 0.0
    %951 = vmatpush2.msra.mxu0 0.0
    %952 = vmatprep.subr.mxu0 0.0
    %953 = vmatpush2.msra.mxu0 0.0
    %954 = vmatprep.subr.mxu0 0.0
    %955 = vmatpush2.msra.mxu0 0.0
    %956 = vmatprep.subr.mxu0 0.0
    %957 = vmatpush2.msra.mxu0 0.0
    %958 = vmatprep.subr.mxu0 0.0
    %959 = vmatpush2.msra.mxu0 0.0
    %960 = vmatprep.subr.mxu0 0.0
    %961 = vmatpush2.msra.mxu0 0.0
    %962 = vmatprep.subr.mxu0 0.0
    %963 = vmatpush2.msra.mxu0 0.0
    %964 = vmatprep.subr.mxu0 0.0
    %965 = vmatpush2.msra.mxu0 0.0
    %966 = vmatprep.subr.mxu0 0.0
    %967 = vmatpush2.msra.mxu0 0.0
    %968 = vmatprep.subr.mxu0 0.0
    %969 = vmatpush2.msra.mxu0 0.0
    %970 = vmatprep.subr.mxu0 0.0
    %971 = vmatpush2.msra.mxu0 0.0
    %972 = vmatprep.subr.mxu0 0.0
    %973 = vmatpush2.msra.mxu0 0.0
    %974 = vmatprep.mubr.f32.mxu0 0.0
    %975 = vmatmul.mubr.f32.gmra.mxu0 %v905
    %v976 = vpop.f32.mrf.mxu0
    %v977 = vadd.f32 0.0, %v976
    %v978 = vpop.f32.mrf.mxu0
    %979 = vmatprep.mubr.f32.mxu0 0.0
    %980 = vmatmul.mubr.f32.gmra.mxu0 %v908
    %v981 = vpop.f32.mrf.mxu0
    %v982 = vadd.f32 0.0, %v981
    %v983 = vpop.f32.mrf.mxu0
    %984 = vdwg.mxu0
    %v985 = vadd.f32 %v167, %v977
    %v986 = vadd.f32 %v168, %v982
    %v987 = vld [vmem:[#allocation7 + $0xdd] sm:$0x1]
    %v988 = vlaneseq
    %v989 = vshrl.u32 %v988, 7
    %v990 = vsub.s32 0, %v989
    %v991 = vrot.slane %v987, %v990
    %v992 = vadd.f32 %v985, %v991
    %v993 = vadd.f32 %v986, %v991
    %996 = vrot.lane.b32.xlu0 %v272, 8
    %v997 = vpop.permute.xlu0 %996
    %998 = vrot.lane.b32.xlu0 %v277, 8
    %v999 = vpop.permute.xlu0 %998
    %v1002 = vsel %vm77, %v115, %v997
    %v1003 = vsel %vm77, %v116, %v999
    %v1004 = vld [vmem:[#allocation7 + $0x40] sm:$0xff]
    %v1005 = vld [vmem:[#allocation7 + $0x48] sm:$0xff]
    %v1006 = vld [vmem:[#allocation7 + $0x50] sm:$0xff]
    %v1007 = vld [vmem:[#allocation7 + $0x58] sm:$0xff]
    %v1008 = vld [vmem:[#allocation7 + $0xde] sm:$0x1]
    %v1009 = vlaneseq
    %v1010 = vshrl.u32 %v1009, 7
    %v1011 = vsub.s32 0, %v1010
    %v1012 = vrot.slane %v1008, %v1011
    %v1014 = vsel %vm407, %v992, 0
    %v1017 = vsel %vm407, %v993, 0
    %1019 = vmatprep.subr.mxu0 0.0
    %1020 = vmatpush1.msra.mxu0 0.0
    %1021 = vmatprep.subr.mxu0 0.0
    %1022 = vmatpush1.msra.mxu0 0.0
    %1023 = vmatprep.subr.mxu0 0.0
    %1024 = vmatpush1.msra.mxu0 0.0
    %1025 = vmatprep.subr.mxu0 0.0
    %1026 = vmatpush1.msra.mxu0 0.0
    %1027 = vmatprep.subr.mxu0 0.0
    %1028 = vmatpush1.msra.mxu0 0.0
    %1029 = vmatprep.subr.mxu0 0.0
    %1030 = vmatpush1.msra.mxu0 0.0
    %1031 = vmatprep.subr.mxu0 0.0
    %1032 = vmatpush1.msra.mxu0 0.0
    %1033 = vmatprep.subr.mxu0 0.0
    %1034 = vmatpush1.msra.mxu0 0.0
    %1035 = vmatprep.subr.mxu0 0.0
    %1036 = vmatpush1.msra.mxu0 0.0
    %1037 = vmatprep.subr.mxu0 0.0
    %1038 = vmatpush1.msra.mxu0 0.0
    %1039 = vmatprep.subr.mxu0 0.0
    %1040 = vmatpush1.msra.mxu0 0.0
    %1041 = vmatprep.subr.mxu0 0.0
    %1042 = vmatpush1.msra.mxu0 0.0
    %1043 = vmatprep.subr.mxu0 0.0
    %1044 = vmatpush1.msra.mxu0 %v1007
    %1045 = vmatprep.subr.mxu0 0.0
    %1046 = vmatpush1.msra.mxu0 %v1006
    %1047 = vmatprep.subr.mxu0 0.0
    %1048 = vmatpush1.msra.mxu0 %v1005
    %1049 = vmatprep.subr.mxu0 0.0
    %1050 = vmatpush1.msra.mxu0 %v1004
    %1051 = vmatprep.subr.mxu0 0.0
    %1052 = vmatpush2.msra.mxu0 0.0
    %1053 = vmatprep.subr.mxu0 0.0
    %1054 = vmatpush2.msra.mxu0 0.0
    %1055 = vmatprep.subr.mxu0 0.0
    %1056 = vmatpush2.msra.mxu0 0.0
    %1057 = vmatprep.subr.mxu0 0.0
    %1058 = vmatpush2.msra.mxu0 0.0
    %1059 = vmatprep.subr.mxu0 0.0
    %1060 = vmatpush2.msra.mxu0 0.0
    %1061 = vmatprep.subr.mxu0 0.0
    %1062 = vmatpush2.msra.mxu0 0.0
    %1063 = vmatprep.subr.mxu0 0.0
    %1064 = vmatpush2.msra.mxu0 0.0
    %1065 = vmatprep.subr.mxu0 0.0
    %1066 = vmatpush2.msra.mxu0 0.0
    %1067 = vmatprep.subr.mxu0 0.0
    %1068 = vmatpush2.msra.mxu0 0.0
    %1069 = vmatprep.subr.mxu0 0.0
    %1070 = vmatpush2.msra.mxu0 0.0
    %1071 = vmatprep.subr.mxu0 0.0
    %1072 = vmatpush2.msra.mxu0 0.0
    %1073 = vmatprep.subr.mxu0 0.0
    %1074 = vmatpush2.msra.mxu0 0.0
    %1075 = vmatprep.subr.mxu0 0.0
    %1076 = vmatpush2.msra.mxu0 0.0
    %1077 = vmatprep.subr.mxu0 0.0
    %1078 = vmatpush2.msra.mxu0 0.0
    %1079 = vmatprep.subr.mxu0 0.0
    %1080 = vmatpush2.msra.mxu0 0.0
    %1081 = vmatprep.subr.mxu0 0.0
    %1082 = vmatpush2.msra.mxu0 0.0
    %1083 = vmatprep.mubr.f32.mxu0 0.0
    %1084 = vmatmul.mubr.f32.gmra.mxu0 %v1014
    %v1085 = vpop.f32.mrf.mxu0
    %v1086 = vadd.f32 %v1012, %v1085
    %v1087 = vpop.f32.mrf.mxu0
    %1088 = vmatprep.mubr.f32.mxu0 0.0
    %1089 = vmatmul.mubr.f32.gmra.mxu0 %v1017
    %v1090 = vpop.f32.mrf.mxu0
    %v1091 = vadd.f32 %v1012, %v1090
    %v1092 = vpop.f32.mrf.mxu0
    %1093 = vdwg.mxu0
    %v1094 = vld [vmem:[#allocation7 + $0x60] sm:$0xff]
    %v1095 = vld [vmem:[#allocation7 + $0x68] sm:$0xff]
    %v1096 = vld [vmem:[#allocation7 + $0x70] sm:$0xff]
    %v1097 = vld [vmem:[#allocation7 + $0x78] sm:$0xff]
    %v1098 = vld [vmem:[#allocation7 + $0xdf] sm:$0x1]
    %v1099 = vlaneseq
    %v1100 = vshrl.u32 %v1099, 7
    %v1101 = vsub.s32 0, %v1100
    %v1102 = vrot.slane %v1098, %v1101
    %v1104 = vsel %vm407, %v1002, 0
    %v1107 = vsel %vm407, %v1003, 0
    %1109 = vmatprep.subr.mxu0 0.0
    %1110 = vmatpush1.msra.mxu0 0.0
    %1111 = vmatprep.subr.mxu0 0.0
    %1112 = vmatpush1.msra.mxu0 0.0
    %1113 = vmatprep.subr.mxu0 0.0
    %1114 = vmatpush1.msra.mxu0 0.0
    %1115 = vmatprep.subr.mxu0 0.0
    %1116 = vmatpush1.msra.mxu0 0.0
    %1117 = vmatprep.subr.mxu0 0.0
    %1118 = vmatpush1.msra.mxu0 0.0
    %1119 = vmatprep.subr.mxu0 0.0
    %1120 = vmatpush1.msra.mxu0 0.0
    %1121 = vmatprep.subr.mxu0 0.0
    %1122 = vmatpush1.msra.mxu0 0.0
    %1123 = vmatprep.subr.mxu0 0.0
    %1124 = vmatpush1.msra.mxu0 0.0
    %1125 = vmatprep.subr.mxu0 0.0
    %1126 = vmatpush1.msra.mxu0 0.0
    %1127 = vmatprep.subr.mxu0 0.0
    %1128 = vmatpush1.msra.mxu0 0.0
    %1129 = vmatprep.subr.mxu0 0.0
    %1130 = vmatpush1.msra.mxu0 0.0
    %1131 = vmatprep.subr.mxu0 0.0
    %1132 = vmatpush1.msra.mxu0 0.0
    %1133 = vmatprep.subr.mxu0 0.0
    %1134 = vmatpush1.msra.mxu0 %v1097
    %1135 = vmatprep.subr.mxu0 0.0
    %1136 = vmatpush1.msra.mxu0 %v1096
    %1137 = vmatprep.subr.mxu0 0.0
    %1138 = vmatpush1.msra.mxu0 %v1095
    %1139 = vmatprep.subr.mxu0 0.0
    %1140 = vmatpush1.msra.mxu0 %v1094
    %1141 = vmatprep.subr.mxu0 0.0
    %1142 = vmatpush2.msra.mxu0 0.0
    %1143 = vmatprep.subr.mxu0 0.0
    %1144 = vmatpush2.msra.mxu0 0.0
    %1145 = vmatprep.subr.mxu0 0.0
    %1146 = vmatpush2.msra.mxu0 0.0
    %1147 = vmatprep.subr.mxu0 0.0
    %1148 = vmatpush2.msra.mxu0 0.0
    %1149 = vmatprep.subr.mxu0 0.0
    %1150 = vmatpush2.msra.mxu0 0.0
    %1151 = vmatprep.subr.mxu0 0.0
    %1152 = vmatpush2.msra.mxu0 0.0
    %1153 = vmatprep.subr.mxu0 0.0
    %1154 = vmatpush2.msra.mxu0 0.0
    %1155 = vmatprep.subr.mxu0 0.0
    %1156 = vmatpush2.msra.mxu0 0.0
    %1157 = vmatprep.subr.mxu0 0.0
    %1158 = vmatpush2.msra.mxu0 0.0
    %1159 = vmatprep.subr.mxu0 0.0
    %1160 = vmatpush2.msra.mxu0 0.0
    %1161 = vmatprep.subr.mxu0 0.0
    %1162 = vmatpush2.msra.mxu0 0.0
    %1163 = vmatprep.subr.mxu0 0.0
    %1164 = vmatpush2.msra.mxu0 0.0
    %1165 = vmatprep.subr.mxu0 0.0
    %1166 = vmatpush2.msra.mxu0 0.0
    %1167 = vmatprep.subr.mxu0 0.0
    %1168 = vmatpush2.msra.mxu0 0.0
    %1169 = vmatprep.subr.mxu0 0.0
    %1170 = vmatpush2.msra.mxu0 0.0
    %1171 = vmatprep.subr.mxu0 0.0
    %1172 = vmatpush2.msra.mxu0 0.0
    %1173 = vmatprep.mubr.f32.mxu0 0.0
    %1174 = vmatmul.mubr.f32.gmra.mxu0 %v1104
    %v1175 = vpop.f32.mrf.mxu0
    %v1176 = vadd.f32 %v1102, %v1175
    %v1177 = vpop.f32.mrf.mxu0
    %1178 = vmatprep.mubr.f32.mxu0 0.0
    %1179 = vmatmul.mubr.f32.gmra.mxu0 %v1107
    %v1180 = vpop.f32.mrf.mxu0
    %v1181 = vadd.f32 %v1102, %v1180
    %v1182 = vpop.f32.mrf.mxu0
    %1183 = vdwg.mxu0
    %v1184 = vmul.f32 %v1086, 0.35355338
    %v1185 = vmul.f32 %v1091, 0.35355338
    %v1186 = vmul.f32 %v1184, %v335
    %v1187 = vmul.f32 %v1185, %v336
    %v1188 = vmul.f32 %v1184, %v337
    %v1189 = vmul.f32 %v1185, %v338
    %v1190 = vmul.f32 %v1184, %v339
    %v1191 = vmul.f32 %v1185, %v340
    %v1192 = vmul.f32 %v1184, %v341
    %v1193 = vmul.f32 %v1185, %v342
    %v1195 = vsel %vm407, %v1186, 0
    %v1198 = vsel %vm407, %v1187, 0
    %v1201 = vsel %vm407, %v1188, 0
    %v1204 = vsel %vm407, %v1189, 0
    %v1207 = vsel %vm407, %v1190, 0
    %v1210 = vsel %vm407, %v1191, 0
    %v1213 = vsel %vm407, %v1192, 0
    %v1216 = vsel %vm407, %v1193, 0
    %v1219 = vsel %vm407, %v1176, 0
    %v1222 = vsel %vm407, %v1181, 0
    %1224 = vmatprep.subr.mxu0 0.0
    %1225 = vmatpush1.xpose.msra.mxu0 0.0
    %1226 = vmatprep.subr.mxu0 0.0
    %1227 = vmatpush1.xpose.msra.mxu0 0.0
    %1228 = vmatprep.subr.mxu0 0.0
    %1229 = vmatpush1.xpose.msra.mxu0 0.0
    %1230 = vmatprep.subr.mxu0 0.0
    %1231 = vmatpush1.xpose.msra.mxu0 0.0
    %1232 = vmatprep.subr.mxu0 0.0
    %1233 = vmatpush1.xpose.msra.mxu0 0.0
    %1234 = vmatprep.subr.mxu0 0.0
    %1235 = vmatpush1.xpose.msra.mxu0 0.0
    %1236 = vmatprep.subr.mxu0 0.0
    %1237 = vmatpush1.xpose.msra.mxu0 0.0
    %1238 = vmatprep.subr.mxu0 0.0
    %1239 = vmatpush1.xpose.msra.mxu0 0.0
    %1240 = vmatprep.subr.mxu0 0.0
    %1241 = vmatpush1.xpose.msra.mxu0 0.0
    %1242 = vmatprep.subr.mxu0 0.0
    %1243 = vmatpush1.xpose.msra.mxu0 0.0
    %1244 = vmatprep.subr.mxu0 0.0
    %1245 = vmatpush1.xpose.msra.mxu0 0.0
    %1246 = vmatprep.subr.mxu0 0.0
    %1247 = vmatpush1.xpose.msra.mxu0 0.0
    %1248 = vmatprep.subr.mxu0 0.0
    %1249 = vmatpush1.xpose.msra.mxu0 0.0
    %1250 = vmatprep.subr.mxu0 0.0
    %1251 = vmatpush1.xpose.msra.mxu0 0.0
    %1252 = vmatprep.subr.mxu0 0.0
    %1253 = vmatpush1.xpose.msra.mxu0 %v1222
    %1254 = vmatprep.subr.mxu0 0.0
    %1255 = vmatpush1.xpose.msra.mxu0 %v1219
    %1256 = vmatprep.subr.mxu0 0.0
    %1257 = vmatpush2.xpose.msra.mxu0 0.0
    %1258 = vmatprep.subr.mxu0 0.0
    %1259 = vmatpush2.xpose.msra.mxu0 0.0
    %1260 = vmatprep.subr.mxu0 0.0
    %1261 = vmatpush2.xpose.msra.mxu0 0.0
    %1262 = vmatprep.subr.mxu0 0.0
    %1263 = vmatpush2.xpose.msra.mxu0 0.0
    %1264 = vmatprep.subr.mxu0 0.0
    %1265 = vmatpush2.xpose.msra.mxu0 0.0
    %1266 = vmatprep.subr.mxu0 0.0
    %1267 = vmatpush2.xpose.msra.mxu0 0.0
    %1268 = vmatprep.subr.mxu0 0.0
    %1269 = vmatpush2.xpose.msra.mxu0 0.0
    %1270 = vmatprep.subr.mxu0 0.0
    %1271 = vmatpush2.xpose.msra.mxu0 0.0
    %1272 = vmatprep.subr.mxu0 0.0
    %1273 = vmatpush2.xpose.msra.mxu0 0.0
    %1274 = vmatprep.subr.mxu0 0.0
    %1275 = vmatpush2.xpose.msra.mxu0 0.0
    %1276 = vmatprep.subr.mxu0 0.0
    %1277 = vmatpush2.xpose.msra.mxu0 0.0
    %1278 = vmatprep.subr.mxu0 0.0
    %1279 = vmatpush2.xpose.msra.mxu0 0.0
    %1280 = vmatprep.subr.mxu0 0.0
    %1281 = vmatpush2.xpose.msra.mxu0 0.0
    %1282 = vmatprep.subr.mxu0 0.0
    %1283 = vmatpush2.xpose.msra.mxu0 0.0
    %1284 = vmatprep.subr.mxu0 0.0
    %1285 = vmatpush2.xpose.msra.mxu0 0.0
    %1286 = vmatprep.subr.mxu0 0.0
    %1287 = vmatpush2.xpose.msra.mxu0 0.0
    %1288 = vmatprep.mubr.f32.mxu0 0.0
    %1289 = vmatmul.mubr.f32.gmra.mxu0 %v1195
    %v1290 = vpop.f32.mrf.mxu0
    %v1291 = vadd.f32 %v390, %v1290
    %v1292 = vpop.f32.mrf.mxu0
    %1293 = vmatprep.mubr.f32.mxu0 0.0
    %1294 = vmatmul.mubr.f32.gmra.mxu0 %v1198
    %v1295 = vpop.f32.mrf.mxu0
    %v1296 = vadd.f32 %v391, %v1295
    %v1297 = vpop.f32.mrf.mxu0
    %1298 = vmatprep.mubr.f32.mxu0 0.0
    %1299 = vmatmul.mubr.f32.gmra.mxu0 %v1201
    %v1300 = vpop.f32.mrf.mxu0
    %v1301 = vadd.f32 %v392, %v1300
    %v1302 = vpop.f32.mrf.mxu0
    %1303 = vmatprep.mubr.f32.mxu0 0.0
    %1304 = vmatmul.mubr.f32.gmra.mxu0 %v1204
    %v1305 = vpop.f32.mrf.mxu0
    %v1306 = vadd.f32 %v393, %v1305
    %v1307 = vpop.f32.mrf.mxu0
    %1308 = vmatprep.mubr.f32.mxu0 0.0
    %1309 = vmatmul.mubr.f32.gmra.mxu0 %v1207
    %v1310 = vpop.f32.mrf.mxu0
    %v1311 = vadd.f32 %v394, %v1310
    %v1312 = vpop.f32.mrf.mxu0
    %1313 = vmatprep.mubr.f32.mxu0 0.0
    %1314 = vmatmul.mubr.f32.gmra.mxu0 %v1210
    %v1315 = vpop.f32.mrf.mxu0
    %v1316 = vadd.f32 %v395, %v1315
    %v1317 = vpop.f32.mrf.mxu0
    %1318 = vmatprep.mubr.f32.mxu0 0.0
    %1319 = vmatmul.mubr.f32.gmra.mxu0 %v1213
    %v1320 = vpop.f32.mrf.mxu0
    %v1321 = vadd.f32 %v396, %v1320
    %v1322 = vpop.f32.mrf.mxu0
    %1323 = vmatprep.mubr.f32.mxu0 0.0
    %1324 = vmatmul.mubr.f32.gmra.mxu0 %v1216
    %v1325 = vpop.f32.mrf.mxu0
    %v1326 = vadd.f32 %v397, %v1325
    %v1327 = vpop.f32.mrf.mxu0
    %1328 = vdwg.mxu0
    %v1329 = vsel %vm638, %v1291, -inf
    %1330 = vmax.xlane.f32.xlu0 %v1329
    %v1331 = vpop.xlane.xlu0 %1330
    %v1332 = vsel %vm638, %v1296, -inf
    %1333 = vmax.xlane.f32.xlu0 %v1332
    %v1334 = vpop.xlane.xlu0 %1333
    %v1335 = vsel %vm638, %v1301, -inf
    %1336 = vmax.xlane.f32.xlu0 %v1335
    %v1337 = vpop.xlane.xlu0 %1336
    %v1338 = vsel %vm638, %v1306, -inf
    %1339 = vmax.xlane.f32.xlu0 %v1338
    %v1340 = vpop.xlane.xlu0 %1339
    %v1341 = vsel %vm638, %v1311, -inf
    %1342 = vmax.xlane.f32.xlu0 %v1341
    %v1343 = vpop.xlane.xlu0 %1342
    %v1344 = vsel %vm638, %v1316, -inf
    %1345 = vmax.xlane.f32.xlu0 %v1344
    %v1346 = vpop.xlane.xlu0 %1345
    %v1347 = vsel %vm638, %v1321, -inf
    %1348 = vmax.xlane.f32.xlu0 %v1347
    %v1349 = vpop.xlane.xlu0 %1348
    %v1350 = vsel %vm638, %v1326, -inf
    %1351 = vmax.xlane.f32.xlu0 %v1350
    %v1352 = vpop.xlane.xlu0 %1351
    %v1353 = vsub.f32 %v1291, %v1331
    %v1354 = vsub.f32 %v1296, %v1334
    %v1355 = vsub.f32 %v1301, %v1337
    %v1356 = vsub.f32 %v1306, %v1340
    %v1357 = vsub.f32 %v1311, %v1343
    %v1358 = vsub.f32 %v1316, %v1346
    %v1359 = vsub.f32 %v1321, %v1349
    %v1360 = vsub.f32 %v1326, %v1352
    %v1361 = vmul.f32 %v1353, 1.442695
    %v1362 = vpow.pop %v1361
    %v1363 = vmul.f32 %v1354, 1.442695
    %v1364 = vpow.pop %v1363
    %v1365 = vmul.f32 %v1355, 1.442695
    %v1366 = vpow.pop %v1365
    %v1367 = vmul.f32 %v1356, 1.442695
    %v1368 = vpow.pop %v1367
    %v1369 = vmul.f32 %v1357, 1.442695
    %v1370 = vpow.pop %v1369
    %v1371 = vmul.f32 %v1358, 1.442695
    %v1372 = vpow.pop %v1371
    %v1373 = vmul.f32 %v1359, 1.442695
    %v1374 = vpow.pop %v1373
    %v1375 = vmul.f32 %v1360, 1.442695
    %v1376 = vpow.pop %v1375
    %v1377 = vsel %vm638, %v1362, 0.0
    %1378 = vadd.xlane.f32.xlu0 %v1377
    %v1379 = vpop.xlane.xlu0 %1378
    %v1380 = vsel %vm638, %v1364, 0.0
    %1381 = vadd.xlane.f32.xlu0 %v1380
    %v1382 = vpop.xlane.xlu0 %1381
    %v1383 = vsel %vm638, %v1366, 0.0
    %1384 = vadd.xlane.f32.xlu0 %v1383
    %v1385 = vpop.xlane.xlu0 %1384
    %v1386 = vsel %vm638, %v1368, 0.0
    %1387 = vadd.xlane.f32.xlu0 %v1386
    %v1388 = vpop.xlane.xlu0 %1387
    %v1389 = vsel %vm638, %v1370, 0.0
    %1390 = vadd.xlane.f32.xlu0 %v1389
    %v1391 = vpop.xlane.xlu0 %1390
    %v1392 = vsel %vm638, %v1372, 0.0
    %1393 = vadd.xlane.f32.xlu0 %v1392
    %v1394 = vpop.xlane.xlu0 %1393
    %v1395 = vsel %vm638, %v1374, 0.0
    %1396 = vadd.xlane.f32.xlu0 %v1395
    %v1397 = vpop.xlane.xlu0 %1396
    %v1398 = vsel %vm638, %v1376, 0.0
    %1399 = vadd.xlane.f32.xlu0 %v1398
    %v1400 = vpop.xlane.xlu0 %1399
    %v1401 = vrcp.pop %v1379
    %v1402 = vrcp.pop %v1382
    %v1403 = vrcp.pop %v1385
    %v1404 = vrcp.pop %v1388
    %v1405 = vrcp.pop %v1391
    %v1406 = vrcp.pop %v1394
    %v1407 = vrcp.pop %v1397
    %v1408 = vrcp.pop %v1400
    %v1409 = vmul.f32 %v1379, %v1401
    %v1410 = vmul.f32 %v1382, %v1402
    %v1411 = vmul.f32 %v1385, %v1403
    %v1412 = vmul.f32 %v1388, %v1404
    %v1413 = vmul.f32 %v1391, %v1405
    %v1414 = vmul.f32 %v1394, %v1406
    %v1415 = vmul.f32 %v1397, %v1407
    %v1416 = vmul.f32 %v1400, %v1408
    %v1417 = vsub.f32 2.0, %v1409
    %v1418 = vsub.f32 2.0, %v1410
    %v1419 = vsub.f32 2.0, %v1411
    %v1420 = vsub.f32 2.0, %v1412
    %v1421 = vsub.f32 2.0, %v1413
    %v1422 = vsub.f32 2.0, %v1414
    %v1423 = vsub.f32 2.0, %v1415
    %v1424 = vsub.f32 2.0, %v1416
    %v1425 = vmul.f32 %v1401, %v1417
    %v1426 = vmul.f32 %v1402, %v1418
    %v1427 = vmul.f32 %v1403, %v1419
    %v1428 = vmul.f32 %v1404, %v1420
    %v1429 = vmul.f32 %v1405, %v1421
    %v1430 = vmul.f32 %v1406, %v1422
    %v1431 = vmul.f32 %v1407, %v1423
    %v1432 = vmul.f32 %v1408, %v1424
    %v1433 = vmul.f32 %v1362, %v1425
    %v1434 = vmul.f32 %v1364, %v1426
    %v1435 = vmul.f32 %v1366, %v1427
    %v1436 = vmul.f32 %v1368, %v1428
    %v1437 = vmul.f32 %v1370, %v1429
    %v1438 = vmul.f32 %v1372, %v1430
    %v1439 = vmul.f32 %v1374, %v1431
    %v1440 = vmul.f32 %v1376, %v1432
    %1441 = vrot.lane.b32.xlu0 %v1176, 96
    %v1442 = vpop.permute.xlu0 %1441
    %1443 = vrot.lane.b32.xlu0 %v1181, 96
    %v1444 = vpop.permute.xlu0 %1443
    %v1448 = vsel %vm638, %v1433, 0
    %v1451 = vsel %vm638, %v1434, 0
    %v1454 = vsel %vm638, %v1435, 0
    %v1457 = vsel %vm638, %v1436, 0
    %v1460 = vsel %vm638, %v1437, 0
    %v1463 = vsel %vm638, %v1438, 0
    %v1466 = vsel %vm638, %v1439, 0
    %v1469 = vsel %vm638, %v1440, 0
    %1471 = vmatprep.subr.mxu0 0.0
    %1472 = vmatpush1.msra.mxu0 0.0
    %1473 = vmatprep.subr.mxu0 0.0
    %1474 = vmatpush1.msra.mxu0 0.0
    %1475 = vmatprep.subr.mxu0 0.0
    %1476 = vmatpush1.msra.mxu0 0.0
    %1477 = vmatprep.subr.mxu0 0.0
    %1478 = vmatpush1.msra.mxu0 0.0
    %1479 = vmatprep.subr.mxu0 0.0
    %1480 = vmatpush1.msra.mxu0 0.0
    %1481 = vmatprep.subr.mxu0 0.0
    %1482 = vmatpush1.msra.mxu0 0.0
    %1483 = vmatprep.subr.mxu0 0.0
    %1484 = vmatpush1.msra.mxu0 0.0
    %1485 = vmatprep.subr.mxu0 0.0
    %1486 = vmatpush1.msra.mxu0 0.0
    %1487 = vmatprep.subr.mxu0 0.0
    %1488 = vmatpush1.msra.mxu0 0.0
    %1489 = vmatprep.subr.mxu0 0.0
    %1490 = vmatpush1.msra.mxu0 0.0
    %1491 = vmatprep.subr.mxu0 0.0
    %1492 = vmatpush1.msra.mxu0 0.0
    %1493 = vmatprep.subr.mxu0 0.0
    %1494 = vmatpush1.msra.mxu0 0.0
    %1495 = vmatprep.subr.mxu0 0.0
    %1496 = vmatpush1.msra.mxu0 0.0
    %1497 = vmatprep.subr.mxu0 0.0
    %1498 = vmatpush1.msra.mxu0 0.0
    %1499 = vmatprep.subr.mxu0 0.0
    %1500 = vmatpush1.msra.mxu0 %v1444
    %1501 = vmatprep.subr.mxu0 0.0
    %1502 = vmatpush1.msra.mxu0 %v1442
    %1503 = vmatprep.subr.mxu0 0.0
    %1504 = vmatpush2.msra.mxu0 0.0
    %1505 = vmatprep.subr.mxu0 0.0
    %1506 = vmatpush2.msra.mxu0 0.0
    %1507 = vmatprep.subr.mxu0 0.0
    %1508 = vmatpush2.msra.mxu0 0.0
    %1509 = vmatprep.subr.mxu0 0.0
    %1510 = vmatpush2.msra.mxu0 0.0
    %1511 = vmatprep.subr.mxu0 0.0
    %1512 = vmatpush2.msra.mxu0 0.0
    %1513 = vmatprep.subr.mxu0 0.0
    %1514 = vmatpush2.msra.mxu0 0.0
    %1515 = vmatprep.subr.mxu0 0.0
    %1516 = vmatpush2.msra.mxu0 0.0
    %1517 = vmatprep.subr.mxu0 0.0
    %1518 = vmatpush2.msra.mxu0 0.0
    %1519 = vmatprep.subr.mxu0 0.0
    %1520 = vmatpush2.msra.mxu0 0.0
    %1521 = vmatprep.subr.mxu0 0.0
    %1522 = vmatpush2.msra.mxu0 0.0
    %1523 = vmatprep.subr.mxu0 0.0
    %1524 = vmatpush2.msra.mxu0 0.0
    %1525 = vmatprep.subr.mxu0 0.0
    %1526 = vmatpush2.msra.mxu0 0.0
    %1527 = vmatprep.subr.mxu0 0.0
    %1528 = vmatpush2.msra.mxu0 0.0
    %1529 = vmatprep.subr.mxu0 0.0
    %1530 = vmatpush2.msra.mxu0 0.0
    %1531 = vmatprep.subr.mxu0 0.0
    %1532 = vmatpush2.msra.mxu0 0.0
    %1533 = vmatprep.subr.mxu0 0.0
    %1534 = vmatpush2.msra.mxu0 0.0
    %1535 = vmatprep.mubr.f32.mxu0 0.0
    %1536 = vmatmul.mubr.f32.gmra.mxu0 %v1448
    %v1537 = vpop.f32.mrf.mxu0
    %v1538 = vadd.f32 0.0, %v1537
    %v1539 = vpop.f32.mrf.mxu0
    %1540 = vmatprep.mubr.f32.mxu0 0.0
    %1541 = vmatmul.mubr.f32.gmra.mxu0 %v1451
    %v1542 = vpop.f32.mrf.mxu0
    %v1543 = vadd.f32 0.0, %v1542
    %v1544 = vpop.f32.mrf.mxu0
    %1545 = vmatprep.mubr.f32.mxu0 0.0
    %1546 = vmatmul.mubr.f32.gmra.mxu0 %v1454
    %v1547 = vpop.f32.mrf.mxu0
    %v1548 = vadd.f32 0.0, %v1547
    %v1549 = vpop.f32.mrf.mxu0
    %1550 = vmatprep.mubr.f32.mxu0 0.0
    %1551 = vmatmul.mubr.f32.gmra.mxu0 %v1457
    %v1552 = vpop.f32.mrf.mxu0
    %v1553 = vadd.f32 0.0, %v1552
    %v1554 = vpop.f32.mrf.mxu0
    %1555 = vmatprep.mubr.f32.mxu0 0.0
    %1556 = vmatmul.mubr.f32.gmra.mxu0 %v1460
    %v1557 = vpop.f32.mrf.mxu0
    %v1558 = vadd.f32 0.0, %v1557
    %v1559 = vpop.f32.mrf.mxu0
    %1560 = vmatprep.mubr.f32.mxu0 0.0
    %1561 = vmatmul.mubr.f32.gmra.mxu0 %v1463
    %v1562 = vpop.f32.mrf.mxu0
    %v1563 = vadd.f32 0.0, %v1562
    %v1564 = vpop.f32.mrf.mxu0
    %1565 = vmatprep.mubr.f32.mxu0 0.0
    %1566 = vmatmul.mubr.f32.gmra.mxu0 %v1466
    %v1567 = vpop.f32.mrf.mxu0
    %v1568 = vadd.f32 0.0, %v1567
    %v1569 = vpop.f32.mrf.mxu0
    %1570 = vmatprep.mubr.f32.mxu0 0.0
    %1571 = vmatmul.mubr.f32.gmra.mxu0 %v1469
    %v1572 = vpop.f32.mrf.mxu0
    %v1573 = vadd.f32 0.0, %v1572
    %v1574 = vpop.f32.mrf.mxu0
    %1575 = vdwg.mxu0
    %v1576 = vmul.f32 %v1538, %v335
    %v1577 = vmul.f32 %v1543, %v336
    %v1578 = vmul.f32 %v1548, %v337
    %v1579 = vmul.f32 %v1553, %v338
    %v1580 = vmul.f32 %v1558, %v339
    %v1581 = vmul.f32 %v1563, %v340
    %v1582 = vmul.f32 %v1568, %v341
    %v1583 = vmul.f32 %v1573, %v342
    %v1584 = vadd.f32 %v1576, %v1578
    %v1585 = vadd.f32 %v1577, %v1579
    %v1586 = vadd.f32 %v1584, %v1580
    %v1587 = vadd.f32 %v1585, %v1581
    %v1588 = vadd.f32 %v1586, %v1582
    %v1589 = vadd.f32 %v1587, %v1583
    %v1590 = vld [vmem:[#allocation7 + $0x80] sm:$0xff]
    %v1591 = vld [vmem:[#allocation7 + $0x88] sm:$0xff]
    %v1592 = vld [vmem:[#allocation7 + $0x90] sm:$0xff]
    %v1593 = vld [vmem:[#allocation7 + $0x98] sm:$0xff]
    %v1595 = vsel %vm407, %v1588, 0
    %v1598 = vsel %vm407, %v1589, 0
    %1600 = vmatprep.subr.mxu0 0.0
    %1601 = vmatpush1.msra.mxu0 0.0
    %1602 = vmatprep.subr.mxu0 0.0
    %1603 = vmatpush1.msra.mxu0 0.0
    %1604 = vmatprep.subr.mxu0 0.0
    %1605 = vmatpush1.msra.mxu0 0.0
    %1606 = vmatprep.subr.mxu0 0.0
    %1607 = vmatpush1.msra.mxu0 0.0
    %1608 = vmatprep.subr.mxu0 0.0
    %1609 = vmatpush1.msra.mxu0 0.0
    %1610 = vmatprep.subr.mxu0 0.0
    %1611 = vmatpush1.msra.mxu0 0.0
    %1612 = vmatprep.subr.mxu0 0.0
    %1613 = vmatpush1.msra.mxu0 0.0
    %1614 = vmatprep.subr.mxu0 0.0
    %1615 = vmatpush1.msra.mxu0 0.0
    %1616 = vmatprep.subr.mxu0 0.0
    %1617 = vmatpush1.msra.mxu0 0.0
    %1618 = vmatprep.subr.mxu0 0.0
    %1619 = vmatpush1.msra.mxu0 0.0
    %1620 = vmatprep.subr.mxu0 0.0
    %1621 = vmatpush1.msra.mxu0 0.0
    %1622 = vmatprep.subr.mxu0 0.0
    %1623 = vmatpush1.msra.mxu0 0.0
    %1624 = vmatprep.subr.mxu0 0.0
    %1625 = vmatpush1.msra.mxu0 %v1593
    %1626 = vmatprep.subr.mxu0 0.0
    %1627 = vmatpush1.msra.mxu0 %v1592
    %1628 = vmatprep.subr.mxu0 0.0
    %1629 = vmatpush1.msra.mxu0 %v1591
    %1630 = vmatprep.subr.mxu0 0.0
    %1631 = vmatpush1.msra.mxu0 %v1590
    %1632 = vmatprep.subr.mxu0 0.0
    %1633 = vmatpush2.msra.mxu0 0.0
    %1634 = vmatprep.subr.mxu0 0.0
    %1635 = vmatpush2.msra.mxu0 0.0
    %1636 = vmatprep.subr.mxu0 0.0
    %1637 = vmatpush2.msra.mxu0 0.0
    %1638 = vmatprep.subr.mxu0 0.0
    %1639 = vmatpush2.msra.mxu0 0.0
    %1640 = vmatprep.subr.mxu0 0.0
    %1641 = vmatpush2.msra.mxu0 0.0
    %1642 = vmatprep.subr.mxu0 0.0
    %1643 = vmatpush2.msra.mxu0 0.0
    %1644 = vmatprep.subr.mxu0 0.0
    %1645 = vmatpush2.msra.mxu0 0.0
    %1646 = vmatprep.subr.mxu0 0.0
    %1647 = vmatpush2.msra.mxu0 0.0
    %1648 = vmatprep.subr.mxu0 0.0
    %1649 = vmatpush2.msra.mxu0 0.0
    %1650 = vmatprep.subr.mxu0 0.0
    %1651 = vmatpush2.msra.mxu0 0.0
    %1652 = vmatprep.subr.mxu0 0.0
    %1653 = vmatpush2.msra.mxu0 0.0
    %1654 = vmatprep.subr.mxu0 0.0
    %1655 = vmatpush2.msra.mxu0 0.0
    %1656 = vmatprep.subr.mxu0 0.0
    %1657 = vmatpush2.msra.mxu0 0.0
    %1658 = vmatprep.subr.mxu0 0.0
    %1659 = vmatpush2.msra.mxu0 0.0
    %1660 = vmatprep.subr.mxu0 0.0
    %1661 = vmatpush2.msra.mxu0 0.0
    %1662 = vmatprep.subr.mxu0 0.0
    %1663 = vmatpush2.msra.mxu0 0.0
    %1664 = vmatprep.mubr.f32.mxu0 0.0
    %1665 = vmatmul.mubr.f32.gmra.mxu0 %v1595
    %v1666 = vpop.f32.mrf.mxu0
    %v1667 = vadd.f32 0.0, %v1666
    %v1668 = vpop.f32.mrf.mxu0
    %1669 = vmatprep.mubr.f32.mxu0 0.0
    %1670 = vmatmul.mubr.f32.gmra.mxu0 %v1598
    %v1671 = vpop.f32.mrf.mxu0
    %v1672 = vadd.f32 0.0, %v1671
    %v1673 = vpop.f32.mrf.mxu0
    %1674 = vdwg.mxu0
    %v1675 = vadd.f32 %v992, %v1667
    %v1676 = vadd.f32 %v993, %v1672
    %v1677 = vld [vmem:[#allocation7 + $0xe0] sm:$0x1]
    %v1678 = vlaneseq
    %v1679 = vshrl.u32 %v1678, 7
    %v1680 = vsub.s32 0, %v1679
    %v1681 = vrot.slane %v1677, %v1680
    %v1682 = vadd.f32 %v1675, %v1681
    %v1683 = vadd.f32 %v1676, %v1681
    %v1684 = vld [vmem:[#allocation7 + $0xe1] sm:$0x1]
    %v1685 = vld [vmem:[#allocation7 + $0xe2] sm:$0x1]
    %1688 = vrot.lane.b32.xlu0 %v1682, 120
    %v1689 = vpop.permute.xlu0 %1688
    %1690 = vrot.lane.b32.xlu0 %v1683, 120
    %v1691 = vpop.permute.xlu0 %1690
    %v1694 = vsel %vm119, %v1689, 0.0
    %1695 = vadd.xlane.f32.xlu0 %v1694
    %v1696 = vpop.xlane.xlu0 %1695
    %v1697 = vsel %vm119, %v1691, 0.0
    %1698 = vadd.xlane.f32.xlu0 %v1697
    %v1699 = vpop.xlane.xlu0 %1698
    %v1700 = vmul.f32 %v1696, %v126
    %v1701 = vmul.f32 %v1699, %v126
    %v1702 = vsub.f32 %v1682, %v1700
    %v1703 = vsub.f32 %v1683, %v1701
    %v1704 = vmul.f32 %v1702, %v1702
    %v1705 = vmul.f32 %v1703, %v1703
    %1708 = vrot.lane.b32.xlu0 %v1704, 120
    %v1709 = vpop.permute.xlu0 %1708
    %1710 = vrot.lane.b32.xlu0 %v1705, 120
    %v1711 = vpop.permute.xlu0 %1710
    %v1714 = vsel %vm119, %v1709, 0.0
    %1715 = vadd.xlane.f32.xlu0 %v1714
    %v1716 = vpop.xlane.xlu0 %1715
    %v1717 = vsel %vm119, %v1711, 0.0
    %1718 = vadd.xlane.f32.xlu0 %v1717
    %v1719 = vpop.xlane.xlu0 %1718
    %v1720 = vmul.f32 %v1716, %v126
    %v1721 = vmul.f32 %v1719, %v126
    %v1722 = vadd.f32 %v1720, 1e-05
    %v1723 = vadd.f32 %v1721, 1e-05
    %v1724 = vrsqrt.pop %v1722
    %v1725 = vrsqrt.pop %v1723
    %v1726 = vmul.f32 %v1702, %v1724
    %v1727 = vmul.f32 %v1703, %v1725
    %v1728 = vlaneseq
    %v1729 = vshrl.u32 %v1728, 7
    %v1730 = vsub.s32 0, %v1729
    %v1731 = vrot.slane %v1684, %v1730
    %1733 = vrot.lane.b32.xlu0 %v1731, 8
    %v1734 = vpop.permute.xlu0 %1733
    %v1736 = vmul.f32 %v1726, %v1734
    %v1737 = vmul.f32 %v1727, %v1734
    %v1738 = vlaneseq
    %v1739 = vshrl.u32 %v1738, 7
    %v1740 = vsub.s32 0, %v1739
    %v1741 = vrot.slane %v1685, %v1740
    %1743 = vrot.lane.b32.xlu0 %v1741, 8
    %v1744 = vpop.permute.xlu0 %1743
    %v1746 = vadd.f32 %v1736, %v1744
    %v1747 = vadd.f32 %v1737, %v1744
    %v1748 = vld [vmem:[#allocation7 + $0xa0] sm:$0xff]
    %v1749 = vld [vmem:[#allocation7 + $0xa8] sm:$0xff]
    %v1750 = vld [vmem:[#allocation7 + $0xb0] sm:$0xff]
    %v1751 = vld [vmem:[#allocation7 + $0xe3] sm:$0x1]
    %v1752 = vlaneseq
    %v1753 = vshrl.u32 %v1752, 7
    %v1754 = vsub.s32 0, %v1753
    %v1755 = vrot.slane %v1751, %v1754
    %1758 = vrot.lane.b32.xlu0 %v1746, 120
    %v1759 = vpop.permute.xlu0 %1758
    %1760 = vrot.lane.b32.xlu0 %v1747, 120
    %v1761 = vpop.permute.xlu0 %1760
    %v1762 = vsel %vm119, %v1759, 0
    %v1764 = vsel %vm119, %v1761, 0
    %1766 = vmatprep.subr.mxu0 0.0
    %1767 = vmatpush1.msra.mxu0 0.0
    %1768 = vmatprep.subr.mxu0 0.0
    %1769 = vmatpush1.msra.mxu0 0.0
    %1770 = vmatprep.subr.mxu0 0.0
    %1771 = vmatpush1.msra.mxu0 0.0
    %1772 = vmatprep.subr.mxu0 0.0
    %1773 = vmatpush1.msra.mxu0 0.0
    %1774 = vmatprep.subr.mxu0 0.0
    %1775 = vmatpush1.msra.mxu0 0.0
    %1776 = vmatprep.subr.mxu0 0.0
    %1777 = vmatpush1.msra.mxu0 0.0
    %1778 = vmatprep.subr.mxu0 0.0
    %1779 = vmatpush1.msra.mxu0 0.0
    %1780 = vmatprep.subr.mxu0 0.0
    %1781 = vmatpush1.msra.mxu0 0.0
    %1782 = vmatprep.subr.mxu0 0.0
    %1783 = vmatpush1.msra.mxu0 0.0
    %1784 = vmatprep.subr.mxu0 0.0
    %1785 = vmatpush1.msra.mxu0 0.0
    %1786 = vmatprep.subr.mxu0 0.0
    %1787 = vmatpush1.msra.mxu0 0.0
    %1788 = vmatprep.subr.mxu0 0.0
    %1789 = vmatpush1.msra.mxu0 0.0
    %1790 = vmatprep.subr.mxu0 0.0
    %1791 = vmatpush1.msra.mxu0 0.0
    %1792 = vmatprep.subr.mxu0 0.0
    %1793 = vmatpush1.msra.mxu0 %v1750
    %1794 = vmatprep.subr.mxu0 0.0
    %1795 = vmatpush1.msra.mxu0 %v1749
    %1796 = vmatprep.subr.mxu0 0.0
    %1797 = vmatpush1.msra.mxu0 %v1748
    %1798 = vmatprep.subr.mxu0 0.0
    %1799 = vmatpush2.msra.mxu0 0.0
    %1800 = vmatprep.subr.mxu0 0.0
    %1801 = vmatpush2.msra.mxu0 0.0
    %1802 = vmatprep.subr.mxu0 0.0
    %1803 = vmatpush2.msra.mxu0 0.0
    %1804 = vmatprep.subr.mxu0 0.0
    %1805 = vmatpush2.msra.mxu0 0.0
    %1806 = vmatprep.subr.mxu0 0.0
    %1807 = vmatpush2.msra.mxu0 0.0
    %1808 = vmatprep.subr.mxu0 0.0
    %1809 = vmatpush2.msra.mxu0 0.0
    %1810 = vmatprep.subr.mxu0 0.0
    %1811 = vmatpush2.msra.mxu0 0.0
    %1812 = vmatprep.subr.mxu0 0.0
    %1813 = vmatpush2.msra.mxu0 0.0
    %1814 = vmatprep.subr.mxu0 0.0
    %1815 = vmatpush2.msra.mxu0 0.0
    %1816 = vmatprep.subr.mxu0 0.0
    %1817 = vmatpush2.msra.mxu0 0.0
    %1818 = vmatprep.subr.mxu0 0.0
    %1819 = vmatpush2.msra.mxu0 0.0
    %1820 = vmatprep.subr.mxu0 0.0
    %1821 = vmatpush2.msra.mxu0 0.0
    %1822 = vmatprep.subr.mxu0 0.0
    %1823 = vmatpush2.msra.mxu0 0.0
    %1824 = vmatprep.subr.mxu0 0.0
    %1825 = vmatpush2.msra.mxu0 0.0
    %1826 = vmatprep.subr.mxu0 0.0
    %1827 = vmatpush2.msra.mxu0 0.0
    %1828 = vmatprep.subr.mxu0 0.0
    %1829 = vmatpush2.msra.mxu0 0.0
    %1830 = vmatprep.mubr.f32.mxu0 0.0
    %1831 = vmatmul.mubr.f32.gmra.mxu0 %v1762
    %v1832 = vpop.f32.mrf.mxu0
    %v1833 = vadd.f32 %v1755, %v1832
    %v1834 = vpop.f32.mrf.mxu0
    %1835 = vmatprep.mubr.f32.mxu0 0.0
    %1836 = vmatmul.mubr.f32.gmra.mxu0 %v1764
    %v1837 = vpop.f32.mrf.mxu0
    %v1838 = vadd.f32 %v1755, %v1837
    %v1839 = vpop.f32.mrf.mxu0
    %1840 = vdwg.mxu0
    %v1841 = vmul.f32 %v1833, 0.5
    %v1842 = vmul.f32 %v1838, 0.5
    %v1843 = vmul.f32 %v1833, 0.70710677
    %v1844 = vmul.f32 %v1838, 0.70710677
    %vm1845 = vcmp.ge.f32.partialorder %v1843, 0.0
    %vm1846 = vcmp.ge.f32.partialorder %v1844, 0.0
    %v1847 = vsel %vm1845, 1.0, -1.0
    %v1848 = vsel %vm1846, 1.0, -1.0
    %v1849 = vand.u32 2147483647, %v1843
    %v1850 = vand.u32 2147483647, %v1844
    %v1851 = vmul.f32 %v1849, 0.3275911
    %v1852 = vmul.f32 %v1850, 0.3275911
    %v1853 = vadd.f32 %v1851, 1.0
    %v1854 = vadd.f32 %v1852, 1.0
    %v1855 = vrcp.pop %v1853
    %v1856 = vmul.f32 1.0, %v1855
    %v1857 = vrcp.pop %v1854
    %v1858 = vmul.f32 1.0, %v1857
    %v1859 = vmul.f32 %v1856, 1.0614054
    %v1860 = vmul.f32 %v1858, 1.0614054
    %v1861 = vadd.f32 %v1859, -1.4531521
    %v1862 = vadd.f32 %v1860, -1.4531521
    %v1863 = vmul.f32 %v1861, %v1856
    %v1864 = vmul.f32 %v1862, %v1858
    %v1865 = vadd.f32 %v1863, 1.4214138
    %v1866 = vadd.f32 %v1864, 1.4214138
    %v1867 = vmul.f32 %v1865, %v1856
    %v1868 = vmul.f32 %v1866, %v1858
    %v1869 = vadd.f32 %v1867, -0.28449672
    %v1870 = vadd.f32 %v1868, -0.28449672
    %v1871 = vmul.f32 %v1869, %v1856
    %v1872 = vmul.f32 %v1870, %v1858
    %v1873 = vadd.f32 %v1871, 0.2548296
    %v1874 = vadd.f32 %v1872, 0.2548296
    %v1875 = vmul.f32 %v1873, %v1856
    %v1876 = vmul.f32 %v1874, %v1858
    %v1877 = vsub.f32 0.0, %v1849
    %v1878 = vsub.f32 0.0, %v1850
    %v1879 = vmul.f32 %v1877, %v1849
    %v1880 = vmul.f32 %v1878, %v1850
    %v1881 = vmul.f32 %v1879, 1.442695
    %v1882 = vpow.pop %v1881
    %v1883 = vmul.f32 %v1880, 1.442695
    %v1884 = vpow.pop %v1883
    %v1885 = vmul.f32 %v1875, %v1882
    %v1886 = vmul.f32 %v1876, %v1884
    %v1887 = vsub.f32 1.0, %v1885
    %v1888 = vsub.f32 1.0, %v1886
    %v1889 = vmul.f32 %v1847, %v1887
    %v1890 = vmul.f32 %v1848, %v1888
    %v1891 = vadd.f32 %v1889, 1.0
    %v1892 = vadd.f32 %v1890, 1.0
    %v1893 = vmul.f32 %v1841, %v1891
    %v1894 = vmul.f32 %v1842, %v1892
    %v1895 = vld [vmem:[#allocation7 + $0xb8] sm:$0xff]
    %v1896 = vld [vmem:[#allocation7 + $0xc0] sm:$0xff]
    %v1897 = vld [vmem:[#allocation7 + $0xc8] sm:$0xff]
    %v1898 = vld [vmem:[#allocation7 + $0xd0] sm:$0xff]
    %v1900 = vsel %vm407, %v1893, 0
    %v1903 = vsel %vm407, %v1894, 0
    %1905 = vmatprep.subr.mxu0 0.0
    %1906 = vmatpush1.msra.mxu0 0.0
    %1907 = vmatprep.subr.mxu0 0.0
    %1908 = vmatpush1.msra.mxu0 0.0
    %1909 = vmatprep.subr.mxu0 0.0
    %1910 = vmatpush1.msra.mxu0 0.0
    %1911 = vmatprep.subr.mxu0 0.0
    %1912 = vmatpush1.msra.mxu0 0.0
    %1913 = vmatprep.subr.mxu0 0.0
    %1914 = vmatpush1.msra.mxu0 0.0
    %1915 = vmatprep.subr.mxu0 0.0
    %1916 = vmatpush1.msra.mxu0 0.0
    %1917 = vmatprep.subr.mxu0 0.0
    %1918 = vmatpush1.msra.mxu0 0.0
    %1919 = vmatprep.subr.mxu0 0.0
    %1920 = vmatpush1.msra.mxu0 0.0
    %1921 = vmatprep.subr.mxu0 0.0
    %1922 = vmatpush1.msra.mxu0 0.0
    %1923 = vmatprep.subr.mxu0 0.0
    %1924 = vmatpush1.msra.mxu0 0.0
    %1925 = vmatprep.subr.mxu0 0.0
    %1926 = vmatpush1.msra.mxu0 0.0
    %1927 = vmatprep.subr.mxu0 0.0
    %1928 = vmatpush1.msra.mxu0 0.0
    %1929 = vmatprep.subr.mxu0 0.0
    %1930 = vmatpush1.msra.mxu0 %v1898
    %1931 = vmatprep.subr.mxu0 0.0
    %1932 = vmatpush1.msra.mxu0 %v1897
    %1933 = vmatprep.subr.mxu0 0.0
    %1934 = vmatpush1.msra.mxu0 %v1896
    %1935 = vmatprep.subr.mxu0 0.0
    %1936 = vmatpush1.msra.mxu0 %v1895
    %1937 = vmatprep.subr.mxu0 0.0
    %1938 = vmatpush2.msra.mxu0 0.0
    %1939 = vmatprep.subr.mxu0 0.0
    %1940 = vmatpush2.msra.mxu0 0.0
    %1941 = vmatprep.subr.mxu0 0.0
    %1942 = vmatpush2.msra.mxu0 0.0
    %1943 = vmatprep.subr.mxu0 0.0
    %1944 = vmatpush2.msra.mxu0 0.0
    %1945 = vmatprep.subr.mxu0 0.0
    %1946 = vmatpush2.msra.mxu0 0.0
    %1947 = vmatprep.subr.mxu0 0.0
    %1948 = vmatpush2.msra.mxu0 0.0
    %1949 = vmatprep.subr.mxu0 0.0
    %1950 = vmatpush2.msra.mxu0 0.0
    %1951 = vmatprep.subr.mxu0 0.0
    %1952 = vmatpush2.msra.mxu0 0.0
    %1953 = vmatprep.subr.mxu0 0.0
    %1954 = vmatpush2.msra.mxu0 0.0
    %1955 = vmatprep.subr.mxu0 0.0
    %1956 = vmatpush2.msra.mxu0 0.0
    %1957 = vmatprep.subr.mxu0 0.0
    %1958 = vmatpush2.msra.mxu0 0.0
    %1959 = vmatprep.subr.mxu0 0.0
    %1960 = vmatpush2.msra.mxu0 0.0
    %1961 = vmatprep.subr.mxu0 0.0
    %1962 = vmatpush2.msra.mxu0 0.0
    %1963 = vmatprep.subr.mxu0 0.0
    %1964 = vmatpush2.msra.mxu0 0.0
    %1965 = vmatprep.subr.mxu0 0.0
    %1966 = vmatpush2.msra.mxu0 0.0
    %1967 = vmatprep.subr.mxu0 0.0
    %1968 = vmatpush2.msra.mxu0 0.0
    %1969 = vmatprep.mubr.f32.mxu0 0.0
    %1970 = vmatmul.mubr.f32.gmra.mxu0 %v1900
    %v1971 = vpop.f32.mrf.mxu0
    %v1972 = vadd.f32 0.0, %v1971
    %v1973 = vpop.f32.mrf.mxu0
    %1974 = vmatprep.mubr.f32.mxu0 0.0
    %1975 = vmatmul.mubr.f32.gmra.mxu0 %v1903
    %v1976 = vpop.f32.mrf.mxu0
    %v1977 = vadd.f32 0.0, %v1976
    %v1978 = vpop.f32.mrf.mxu0
    %1979 = vdwg.mxu0
    %1982 = vrot.lane.b32.xlu0 %v1972, 8
    %v1983 = vpop.permute.xlu0 %1982
    %1984 = vrot.lane.b32.xlu0 %v1977, 8
    %v1985 = vpop.permute.xlu0 %1984
    %v1988 = vadd.f32 %v1682, %v1983
    %v1989 = vadd.f32 %v1683, %v1985
    %v1990 = vld [vmem:[#allocation7 + $0xe4] sm:$0x1]
    %v1991 = vlaneseq
    %v1992 = vshrl.u32 %v1991, 7
    %v1993 = vsub.s32 0, %v1992
    %v1994 = vrot.slane %v1990, %v1993
    %1996 = vrot.lane.b32.xlu0 %v1994, 8
    %v1997 = vpop.permute.xlu0 %1996
    %v1999 = vadd.f32 %v1988, %v1997
    %v2000 = vadd.f32 %v1989, %v1997
    %v2001 = vsel %vm77, %v1682, %v1999
    %v2002 = vsel %vm77, %v1683, %v2000
    %2003 = vst.msk [vmem:[%s4] sm:$0xff] %vm407, %v2001
    %2004 = vst.msk [vmem:[%s4 + $0x8] sm:$0xff] %vm407, %v2002
    // Predicated region
    $region34: #{trs_decoder_layer.1} parent=1 // pred_check
      _
    $region35: #{trs_decoder_layer.1} parent=1 // pred_check_branch
      %2006 = sbr.rel (0) target = $region37
    $region36: #{trs_decoder_layer.1} parent=1 // pred_region
      _
    $region37: #{trs_decoder_layer.1} parent=1 // pred_fallthru
      _
    // Predicated region
    $region38: #{trs_decoder_layer.1} parent=1 // pred_check
      _
    $region39: #{trs_decoder_layer.1} parent=1 // pred_check_branch
      %2008 = sbr.rel (0) target = $region41
    $region40: #{trs_decoder_layer.1} parent=1 // pred_region
      _
    $region41: #{trs_decoder_layer.1} parent=1 // pred_fallthru
      _
    %2009 = vsyncpa [#allocation3], 1
    %2010 = vsyncpa [#allocation5], 1
    %2011 = vsyncpa [#allocation8], 1

</llo_original>
